<compile_context>
chip_gen: v6e
topology: v6e:2x2x1
jax: 0.10.0
libtpu: 0.0.40
codegen_flags: <defaults>
</compile_context>

<pallas_src>
import functools
import math

import jax
import jax.numpy as jnp
import numpy as np
from jax.experimental import pallas as pl
from jax.experimental.pallas import tpu as pltpu

_VMEM = pl.BlockSpec(memory_space=pltpu.MemorySpace.VMEM)


def _swish(x):
    return x * jax.nn.sigmoid(x)


# ----------------------------------------------------------------------------
# Fused kernel: encoder (all agents) -> PoE / reparametrize -> decoder
# ----------------------------------------------------------------------------
def _mvae_fused_kernel(
    obs_ref,                       # (2, Nv, 1)  observation feature k per valid agent
    ew1_ref, eb1_ref,              # (2, 1, H), (1, H)          encoder layer 1
    ew2_ref, eb2_ref,              # (H, H),   (1, H)           encoder layer 2
    ew3_ref, eb3_ref,              # (4, H, D), (4, 1, D)       encoder heads: mu_j0, mu_j1, lv_j0, lv_j1
    dw1_ref, db1_ref,              # (D, H),   (1, H)           decoder layer 1
    dw2_ref, db2_ref,              # (H, H),   (1, H)           decoder layer 2
    dw3_ref, db3_ref,              # (H, E),   (1, E)           decoder layer 3 (E = queue_len + 1)
    sel_ref,                       # (4, Nv, Nv) sel[2*jg+je, g, e]: multiplicity of expert
                                   #             (agent e, branch je) in PoE group (agent g, branch jg)
    nunit_ref,                     # (2, Nv, 1)  count of N(0, I) experts (prior + missing placeholders)
    ispoe_ref,                     # (Nv, 1)     1.0 -> PoE path, 0.0 -> private path
    eps_ref,                       # (2, Nv, D)  N(0, 1) draws per branch
    stats_ref,                     # (8, Nv, D)  [mu_j0, mu_j1, lv_j0, lv_j1, pdmu_j0, pdmu_j1, pdlv_j0, pdlv_j1]
    recon_ref,                     # (2, Nv, E)  decoded observation per branch
    *,
    training,
):
    f32 = jnp.float32

    # ------------------- MessageEncoder (all valid agents batched) ----------
    # First layer has in_features == 2: two VPU broadcast-FMAs instead of a
    # degenerate K=2 MXU matmul.
    h = obs_ref[0] * ew1_ref[0] + obs_ref[1] * ew1_ref[1] + eb1_ref[...]
    h = _swish(h)
    h = _swish(jnp.dot(h, ew2_ref[...], preferred_element_type=f32) + eb2_ref[...])
    # Last layer split into its four D-wide heads (avoids unaligned lane slicing).
    heads = [jnp.dot(h, ew3_ref[k], preferred_element_type=f32) + eb3_ref[k]
             for k in range(4)]
    mu = heads[0:2]                # per branch j: (Nv, D)
    lv = heads[2:4]                # per branch j: (Nv, D)

    # ------------- Product of experts + reparametrize + decoder -------------
    unit_t = 1.0 / (1.0 + 1e-8)                   # T of a N(0, I) expert (prior / placeholder)
    T = [1.0 / (jnp.exp(l) + 1e-8) for l in lv]   # (Nv, D) per expert branch
    muT = [m * t for m, t in zip(mu, T)]
    ispoe = ispoe_ref[...]                        # (Nv, 1) in {0., 1.}

    for j in range(2):                            # branch j of every agent (static unroll)
        sum_t = (jnp.dot(sel_ref[2 * j + 0], T[0], preferred_element_type=f32)
                 + jnp.dot(sel_ref[2 * j + 1], T[1], preferred_element_type=f32)
                 + nunit_ref[j] * unit_t)
        sum_mt = (jnp.dot(sel_ref[2 * j + 0], muT[0], preferred_element_type=f32)
                  + jnp.dot(sel_ref[2 * j + 1], muT[1], preferred_element_type=f32))
        inv_t = 1.0 / sum_t
        pd_mu = sum_mt * inv_t
        pd_lv = jnp.log(inv_t)                    # log(pd_var), pd_var = 1/sum_T

        if training:
            eps = eps_ref[j]
            z_poe = eps * jax.lax.rsqrt(sum_t) + pd_mu        # std = exp(0.5*pd_lv)
            z_priv = eps * jnp.exp(0.5 * lv[j]) + mu[j]
        else:
            z_poe, z_priv = pd_mu, mu[j]
        z = ispoe * z_poe + (1.0 - ispoe) * z_priv            # (Nv, D)

        # MessageDecoder, fused: z never leaves VMEM.
        d = _swish(jnp.dot(z, dw1_ref[...], preferred_element_type=f32) + db1_ref[...])
        d = _swish(jnp.dot(d, dw2_ref[...], preferred_element_type=f32) + db2_ref[...])
        rec = jnp.dot(d, dw3_ref[...], preferred_element_type=f32) + db3_ref[...]

        stats_ref[0 + j] = mu[j]
        stats_ref[2 + j] = lv[j]
        stats_ref[4 + j] = pd_mu
        stats_ref[6 + j] = pd_lv
        recon_ref[j] = rec


# ----------------------------------------------------------------------------
# Parameter init (mirrors nn.Linear + xavier_uniform_)
# ----------------------------------------------------------------------------
def _linear_params(key, fan_in, fan_out):
    kw, kb = jax.random.split(key)
    limit = math.sqrt(6.0 / (fan_in + fan_out))           # xavier_uniform_
    w = jax.random.uniform(kw, (fan_in, fan_out), jnp.float32, -limit, limit)
    bb = 1.0 / math.sqrt(fan_in)                          # nn.Linear default bias init
    b = jax.random.uniform(kb, (fan_out,), jnp.float32, -bb, bb)
    return w, b


# ----------------------------------------------------------------------------
# MVAE (JAX / Pallas)
# ----------------------------------------------------------------------------
class MVAEPallas:
    def __init__(self, n_latents, obs_len, queue_len, hidden_dim, c_group,
                 training=True, key=None):
        self.obs_len = obs_len
        self.training = training
        self.n_latents = n_latents
        self.hidden_dim = hidden_dim
        self.num_emb = queue_len + 1
        self.c_group = list(c_group.values())

        key = jax.random.PRNGKey(0) if key is None else key
        ks = jax.random.split(key, 6)
        D, H, E = n_latents, hidden_dim, self.num_emb

        # belief_encoder: Linear(2,H) Swish Linear(H,H) Swish Linear(H, 4*D)
        w1, b1 = _linear_params(ks[0], 2, H)
        w2, b2 = _linear_params(ks[1], H, H)
        w3, b3 = _linear_params(ks[2], H, 4 * D)
        # belief_decoder: Linear(D,H) Swish Linear(H,H) Swish Linear(H, E)
        v1, c1 = _linear_params(ks[3], D, H)
        v2, c2 = _linear_params(ks[4], H, H)
        v3, c3 = _linear_params(ks[5], H, E)

        # Kernel-friendly layouts (leading-dim indexable heads, (1, n) biases).
        self.ew1 = w1.reshape(2, 1, H)
        self.eb1 = b1.reshape(1, H)
        self.ew2, self.eb2 = w2, b2.reshape(1, H)
        self.ew3 = jnp.transpose(w3.reshape(H, 4, D), (1, 0, 2))   # (4, H, D)
        self.eb3 = b3.reshape(4, 1, D)
        self.dw1, self.db1 = v1, c1.reshape(1, H)
        self.dw2, self.db2 = v2, c2.reshape(1, H)
        self.dw3, self.db3 = v3, c3.reshape(1, E)

    def forward(self, obs, p, key):
        n_agents = len(obs)
        obs_recons = [None] * n_agents
        mus = [None] * n_agents
        logvars = [None] * n_agents

        valid = [i for i, o in enumerate(obs) if o is not None]
        nv = len(valid)
        if nv == 0:
            return obs_recons, mus, logvars
        vidx = {i: v for v, i in enumerate(valid)}

        D, ne = self.n_latents, self.num_emb
        # Single device->host read of the gating vector (the reference PyTorch
        # code branches on p[i][0] in Python too).
        p_np = np.asarray(jax.device_get(jnp.asarray(p))).reshape(n_agents, -1)

        # ---- static topology tables (pure Python / NumPy bookkeeping) ------
        sel = np.zeros((4, nv, nv), np.float32)     # [2*jg + je, group, expert]
        n_unit = np.zeros((2, nv, 1), np.float32)   # prior + missing-expert placeholders
        is_poe = np.zeros((nv, 1), np.float32)

        for i in valid:
            v = vidx[i]
            if float(p_np[i, 0]) < 0.5:
                # Private path: no PoE.  One dummy unit expert keeps log/rsqrt
                # finite; its result is discarded by the is_poe blend.
                n_unit[:, v, 0] = 1.0
                continue
            is_poe[v, 0] = 1.0
            for j in range(2):
                sel[2 * j + j, v, v] += 1.0          # own expert (je == jg == j)
                n_unit[j, v, 0] += 1.0               # universal prior N(0, I)
                for others in self.c_group[i][j]:
                    id_s, id_o = others[0], others[1]
                    if obs[id_s] is None:
                        # Reference appends torch.zeros((1,1,6)): identical to
                        # an extra N(0, I) expert (exact match for n_latents=6).
                        n_unit[j, v, 0] += 1.0
                    else:
                        sel[2 * j + id_o, v, vidx[id_s]] += 1.0

        # ---- batched device inputs ------------------------------------------
        obs_stack = jnp.stack(
            [jnp.asarray(obs[i], jnp.float32).reshape(-1) for i in valid], axis=0)  # (Nv, 2)
        obs_t = obs_stack.T.reshape(2, nv, 1)
        if self.training:
            eps = jax.random.normal(key, (2, nv, D), jnp.float32)
        else:
            eps = jnp.zeros((2, nv, D), jnp.float32)

        stats, recon = pl.pallas_call(
            functools.partial(_mvae_fused_kernel, training=self.training),
            out_shape=(jax.ShapeDtypeStruct((8, nv, D), jnp.float32),
                       jax.ShapeDtypeStruct((2, nv, ne), jnp.float32)),
            in_specs=[_VMEM] * 17,
            out_specs=(_VMEM, _VMEM),
        )(obs_t,
          self.ew1, self.eb1, self.ew2, self.eb2, self.ew3, self.eb3,
          self.dw1, self.db1, self.dw2, self.db2, self.dw3, self.db3,
          jnp.asarray(sel), jnp.asarray(n_unit), jnp.asarray(is_poe), eps)

        # ---- unpack back into the reference's per-agent list structure ------
        for i in valid:
            v = vidx[i]
            if float(p_np[i, 0]) < 0.5:
                mus[i] = stats[0:2, v, :].reshape(1, 2 * D)
                logvars[i] = stats[2:4, v, :].reshape(1, 2 * D)
            else:
                mus[i] = stats[4:6, v, :].reshape(1, 2 * D)
                logvars[i] = stats[6:8, v, :].reshape(1, 2 * D)
            obs_recons[i] = recon[:, v, :].reshape(1, 2 * ne)
        return obs_recons, mus, logvars


# ----------------------------------------------------------------------------
# Pure-JAX mirror of the PyTorch MVAE.forward (correctness check only)
# ----------------------------------------------------------------------------
def _reference_forward(model, obs, p, eps):
    D = model.n_latents
    HI = jax.lax.Precision.HIGHEST
    p_np = np.asarray(jax.device_get(jnp.asarray(p))).reshape(len(obs), -1)

    def linear(x, w, b):
        return jnp.dot(x, w, precision=HI) + b

    def encoder(x):
        w1 = model.ew1.reshape(2, model.hidden_dim)
        w3 = jnp.transpose(model.ew3, (1, 0, 2)).reshape(model.hidden_dim, 4 * D)
        b3 = model.eb3.reshape(4 * D)
        h = _swish(linear(x.astype(jnp.float32), w1, model.eb1))
        h = _swish(linear(h, model.ew2, model.eb2))
        out = linear(h, w3, b3)
        return out[:, :2 * D], out[:, 2 * D:]

    def decoder(z):
        h = _swish(linear(z, model.dw1, model.db1))
        h = _swish(linear(h, model.dw2, model.db2))
        return linear(h, model.dw3, model.db3)

    def product_of_experts(mu, logvar):
        var = jnp.exp(logvar) + 1e-8
        T = 1.0 / var
        pd_mu = jnp.sum(mu * T, axis=1) / jnp.sum(T, axis=1)
        pd_var = 1.0 / jnp.sum(T, axis=1)
        return pd_mu, jnp.log(pd_var)

    valid = [i for i, o in enumerate(obs) if o is not None]
    vidx = {i: v for v, i in enumerate(valid)}

    _mus, _lvs = [], []
    for o in obs:
        if o is None:
            _mus.append(None)
            _lvs.append(None)
            continue
        m, l = encoder(jnp.asarray(o, jnp.float32))
        _mus.append(m.reshape(1, 2, -1))
        _lvs.append(l.reshape(1, 2, -1))

    prior_mu = jnp.zeros((1, 1, D), jnp.float32)
    prior_lv = jnp.zeros((1, 1, D), jnp.float32)
    obs_recons, mus, logvars = [], [], []
    for i, mu in enumerate(_mus):
        if mu is None:
            obs_recons.append(None); mus.append(None); logvars.append(None)
            continue
        v = vidx[i]
        lv = _lvs[i]
        if float(p_np[i, 0]) < 0.5:
            if model.training:
                e = jnp.stack([eps[0, v], eps[1, v]], axis=0)[None]
                z = e * jnp.exp(0.5 * lv) + mu
            else:
                z = mu
            r = decoder(z.reshape(2, D))
            mus.append(mu.reshape(1, -1))
            logvars.append(lv.reshape(1, -1))
            obs_recons.append(r.reshape(1, -1))
            continue
        tmp_mu, tmp_lv, tmp_r = [], [], []
        for j in range(2):
            poem = [prior_mu, mu[:, j, :][:, None, :]]
            poel = [prior_lv, lv[:, j, :][:, None, :]]
            for others in model.c_group[i][j]:
                id_s, id_o = others[0], others[1]
                if _mus[id_s] is None:
                    poem.append(jnp.zeros((1, 1, D), jnp.float32))
                    poel.append(jnp.zeros((1, 1, D), jnp.float32))
                else:
                    poem.append(_mus[id_s][:, id_o, :][:, None, :])
                    poel.append(_lvs[id_s][:, id_o, :][:, None, :])
            pd_mu, pd_lv = product_of_experts(
                jnp.concatenate(poem, axis=1), jnp.concatenate(poel, axis=1))
            z = (eps[j, v][None] * jnp.exp(0.5 * pd_lv) + pd_mu
                 if model.training else pd_mu)
            tmp_mu.append(pd_mu)
            tmp_lv.append(pd_lv)
            tmp_r.append(decoder(z))
        mus.append(jnp.concatenate(tmp_mu, axis=1))
        logvars.append(jnp.concatenate(tmp_lv, axis=1))
        obs_recons.append(jnp.concatenate(tmp_r, axis=1))
    return obs_recons, mus, logvars


# ----------------------------------------------------------------------------
# Demo
# ----------------------------------------------------------------------------
if __name__ == "__main__":
    n_latents, obs_len, queue_len, hidden_dim = 6, 10, 7, 32
    # communication graph: c_group[agent][j] -> list of (id_scheduler, id_obs)
    c_group = {
        0: [[(1, 0)], [(2, 1)]],
        1: [[(0, 1)], [(2, 0)]],
        2: [[(0, 0), (1, 1)], [(1, 0)]],
    }

    root = jax.random.PRNGKey(0)
    k_param, k_obs, k_eps = jax.random.split(root, 3)

    model = MVAEPallas(n_latents, obs_len, queue_len, hidden_dim, c_group,
                       training=True, key=k_param)

    # 3 agents; agent 1 has no observation (exercises None + placeholder paths)
    obs = [
        jax.random.normal(jax.random.fold_in(k_obs, 0), (1, 2), jnp.float32),
        None,
        jax.random.normal(jax.random.fold_in(k_obs, 2), (1, 2), jnp.float32),
    ]
    # p[i][0] < 0.5 -> private (single-expert) path; >= 0.5 -> PoE path
    p = jnp.array([[0.3], [0.9], [0.8]], jnp.float32)

    def run_and_check(mdl, obs, p, key):
        out = mdl.forward(obs, p, key)
        for group in out:
            for t in group:
                if t is not None:
                    jax.block_until_ready(t)
        # Same eps as forward() drew (deterministic in the key).
        nv = sum(o is not None for o in obs)
        eps = (jax.random.normal(key, (2, nv, mdl.n_latents), jnp.float32)
               if mdl.training else jnp.zeros((2, nv, mdl.n_latents), jnp.float32))
        ref = _reference_forward(mdl, obs, p, eps)
        for got_list, ref_list in zip(out, ref):
            for got, want in zip(got_list, ref_list):
                assert (got is None) == (want is None)
                if got is not None:
                    assert got.shape == want.shape, (got.shape, want.shape)
                    assert jnp.allclose(got, want, rtol=5e-2, atol=5e-3), (
                        float(jnp.max(jnp.abs(got - want))))
        return out

    obs_recons, mus, logvars = run_and_check(model, obs, p, k_eps)

    # shape sanity (agent 0: private path, agent 1: None, agent 2: PoE path)
    assert obs_recons[0].shape == (1, 2 * (queue_len + 1))
    assert obs_recons[1] is None
    assert obs_recons[2].shape == (1, 2 * (queue_len + 1))
    assert mus[0].shape == (1, 2 * n_latents)
    assert mus[2].shape == (1, 2 * n_latents)
    assert logvars[2].shape == (1, 2 * n_latents)

    # eval-mode path (z = pd_mu / mu, no eps)
    model.training = False
    run_and_check(model, obs, p, k_eps)

    print("KERNEL_OK")
</pallas_src>

<mosaic_0001>
module attributes {stable_mosaic.version = 11 : i64} {
  func.func @_mvae_fused_kernel(%arg0: memref<2x2x1xf32, #tpu.memory_space<vmem>>, %arg1: memref<2x1x32xf32, #tpu.memory_space<vmem>>, %arg2: memref<1x32xf32, #tpu.memory_space<vmem>>, %arg3: memref<32x32xf32, #tpu.memory_space<vmem>>, %arg4: memref<1x32xf32, #tpu.memory_space<vmem>>, %arg5: memref<4x32x6xf32, #tpu.memory_space<vmem>>, %arg6: memref<4x1x6xf32, #tpu.memory_space<vmem>>, %arg7: memref<6x32xf32, #tpu.memory_space<vmem>>, %arg8: memref<1x32xf32, #tpu.memory_space<vmem>>, %arg9: memref<32x32xf32, #tpu.memory_space<vmem>>, %arg10: memref<1x32xf32, #tpu.memory_space<vmem>>, %arg11: memref<32x8xf32, #tpu.memory_space<vmem>>, %arg12: memref<1x8xf32, #tpu.memory_space<vmem>>, %arg13: memref<4x2x2xf32, #tpu.memory_space<vmem>>, %arg14: memref<2x2x1xf32, #tpu.memory_space<vmem>>, %arg15: memref<2x1xf32, #tpu.memory_space<vmem>>, %arg16: memref<2x2x6xf32, #tpu.memory_space<vmem>>, %arg17: memref<8x2x6xf32, #tpu.memory_space<vmem>>, %arg18: memref<2x2x8xf32, #tpu.memory_space<vmem>>) attributes {dimension_semantics = [], scalar_prefetch = 0 : i64, scratch_operands = 0 : i64, tpu.core_type = #tpu.core_type<tc>} {
    %c0 = arith.constant 0 : index
    %c0_0 = arith.constant 0 : index
    %c0_1 = arith.constant 0 : index
    %0 = vector.load %arg0[%c0, %c0_0, %c0_1] : memref<2x2x1xf32, #tpu.memory_space<vmem>>, vector<1x2x1xf32>
    %1 = vector.shape_cast %0 : vector<1x2x1xf32> to vector<2x1xf32>
    %c0_2 = arith.constant 0 : index
    %c0_3 = arith.constant 0 : index
    %c0_4 = arith.constant 0 : index
    %2 = vector.load %arg1[%c0_2, %c0_3, %c0_4] : memref<2x1x32xf32, #tpu.memory_space<vmem>>, vector<1x1x32xf32>
    %3 = vector.shape_cast %2 : vector<1x1x32xf32> to vector<1x32xf32>
    %4 = vector.broadcast %1 : vector<2x1xf32> to vector<2x32xf32>
    %5 = vector.broadcast %3 : vector<1x32xf32> to vector<2x32xf32>
    %6 = arith.mulf %4, %5 : vector<2x32xf32>
    %c1 = arith.constant 1 : index
    %c0_5 = arith.constant 0 : index
    %c0_6 = arith.constant 0 : index
    %7 = vector.load %arg0[%c1, %c0_5, %c0_6] : memref<2x2x1xf32, #tpu.memory_space<vmem>>, vector<1x2x1xf32>
    %8 = vector.shape_cast %7 : vector<1x2x1xf32> to vector<2x1xf32>
    %c1_7 = arith.constant 1 : index
    %c0_8 = arith.constant 0 : index
    %c0_9 = arith.constant 0 : index
    %9 = vector.load %arg1[%c1_7, %c0_8, %c0_9] : memref<2x1x32xf32, #tpu.memory_space<vmem>>, vector<1x1x32xf32>
    %10 = vector.shape_cast %9 : vector<1x1x32xf32> to vector<1x32xf32>
    %11 = vector.broadcast %8 : vector<2x1xf32> to vector<2x32xf32>
    %12 = vector.broadcast %10 : vector<1x32xf32> to vector<2x32xf32>
    %13 = arith.mulf %11, %12 : vector<2x32xf32>
    %14 = arith.addf %6, %13 : vector<2x32xf32>
    %c0_10 = arith.constant 0 : index
    %c0_11 = arith.constant 0 : index
    %15 = vector.load %arg2[%c0_10, %c0_11] : memref<1x32xf32, #tpu.memory_space<vmem>>, vector<1x32xf32>
    %16 = vector.broadcast %15 : vector<1x32xf32> to vector<2x32xf32>
    %17 = arith.addf %14, %16 : vector<2x32xf32>
    %18 = arith.negf %17 : vector<2x32xf32>
    %19 = math.exp %18 : vector<2x32xf32>
    %cst = arith.constant 1.000000e+00 : f32
    %20 = vector.broadcast %cst : f32 to vector<2x32xf32>
    %21 = arith.addf %20, %19 : vector<2x32xf32>
    %22 = arith.divf %20, %21 : vector<2x32xf32>
    %23 = arith.mulf %17, %22 : vector<2x32xf32>
    %c0_12 = arith.constant 0 : index
    %c0_13 = arith.constant 0 : index
    %24 = vector.load %arg3[%c0_12, %c0_13] : memref<32x32xf32, #tpu.memory_space<vmem>>, vector<32x32xf32>
    %cst_14 = arith.constant dense<0.000000e+00> : vector<2x32xf32>
    %25 = tpu.matmul %23, %24, %cst_14 {dimension_numbers = #tpu.dot_dimension_numbers<[1], [0], [0], [1], [0, 0, 1, 1], [], []>} : vector<2x32xf32>, vector<32x32xf32>, vector<2x32xf32> -> vector<2x32xf32>
    %c0_15 = arith.constant 0 : index
    %c0_16 = arith.constant 0 : index
    %26 = vector.load %arg4[%c0_15, %c0_16] : memref<1x32xf32, #tpu.memory_space<vmem>>, vector<1x32xf32>
    %27 = vector.broadcast %26 : vector<1x32xf32> to vector<2x32xf32>
    %28 = arith.addf %25, %27 : vector<2x32xf32>
    %29 = arith.negf %28 : vector<2x32xf32>
    %30 = math.exp %29 : vector<2x32xf32>
    %cst_17 = arith.constant 1.000000e+00 : f32
    %31 = vector.broadcast %cst_17 : f32 to vector<2x32xf32>
    %32 = arith.addf %31, %30 : vector<2x32xf32>
    %33 = arith.divf %31, %32 : vector<2x32xf32>
    %34 = arith.mulf %28, %33 : vector<2x32xf32>
    %c0_18 = arith.constant 0 : index
    %c0_19 = arith.constant 0 : index
    %c0_20 = arith.constant 0 : index
    %35 = vector.load %arg5[%c0_18, %c0_19, %c0_20] : memref<4x32x6xf32, #tpu.memory_space<vmem>>, vector<1x32x6xf32>
    %36 = vector.shape_cast %35 : vector<1x32x6xf32> to vector<32x6xf32>
    %cst_21 = arith.constant dense<0.000000e+00> : vector<2x6xf32>
    %37 = tpu.matmul %34, %36, %cst_21 {dimension_numbers = #tpu.dot_dimension_numbers<[1], [0], [0], [1], [0, 0, 1, 1], [], []>} : vector<2x32xf32>, vector<32x6xf32>, vector<2x6xf32> -> vector<2x6xf32>
    %c0_22 = arith.constant 0 : index
    %c0_23 = arith.constant 0 : index
    %c0_24 = arith.constant 0 : index
    %38 = vector.load %arg6[%c0_22, %c0_23, %c0_24] : memref<4x1x6xf32, #tpu.memory_space<vmem>>, vector<1x1x6xf32>
    %39 = vector.shape_cast %38 : vector<1x1x6xf32> to vector<1x6xf32>
    %40 = vector.broadcast %39 : vector<1x6xf32> to vector<2x6xf32>
    %41 = arith.addf %37, %40 : vector<2x6xf32>
    %c1_25 = arith.constant 1 : index
    %c0_26 = arith.constant 0 : index
    %c0_27 = arith.constant 0 : index
    %42 = vector.load %arg5[%c1_25, %c0_26, %c0_27] : memref<4x32x6xf32, #tpu.memory_space<vmem>>, vector<1x32x6xf32>
    %43 = vector.shape_cast %42 : vector<1x32x6xf32> to vector<32x6xf32>
    %cst_28 = arith.constant dense<0.000000e+00> : vector<2x6xf32>
    %44 = tpu.matmul %34, %43, %cst_28 {dimension_numbers = #tpu.dot_dimension_numbers<[1], [0], [0], [1], [0, 0, 1, 1], [], []>} : vector<2x32xf32>, vector<32x6xf32>, vector<2x6xf32> -> vector<2x6xf32>
    %c1_29 = arith.constant 1 : index
    %c0_30 = arith.constant 0 : index
    %c0_31 = arith.constant 0 : index
    %45 = vector.load %arg6[%c1_29, %c0_30, %c0_31] : memref<4x1x6xf32, #tpu.memory_space<vmem>>, vector<1x1x6xf32>
    %46 = vector.shape_cast %45 : vector<1x1x6xf32> to vector<1x6xf32>
    %47 = vector.broadcast %46 : vector<1x6xf32> to vector<2x6xf32>
    %48 = arith.addf %44, %47 : vector<2x6xf32>
    %c2 = arith.constant 2 : index
    %c0_32 = arith.constant 0 : index
    %c0_33 = arith.constant 0 : index
    %49 = vector.load %arg5[%c2, %c0_32, %c0_33] : memref<4x32x6xf32, #tpu.memory_space<vmem>>, vector<1x32x6xf32>
    %50 = vector.shape_cast %49 : vector<1x32x6xf32> to vector<32x6xf32>
    %cst_34 = arith.constant dense<0.000000e+00> : vector<2x6xf32>
    %51 = tpu.matmul %34, %50, %cst_34 {dimension_numbers = #tpu.dot_dimension_numbers<[1], [0], [0], [1], [0, 0, 1, 1], [], []>} : vector<2x32xf32>, vector<32x6xf32>, vector<2x6xf32> -> vector<2x6xf32>
    %c2_35 = arith.constant 2 : index
    %c0_36 = arith.constant 0 : index
    %c0_37 = arith.constant 0 : index
    %52 = vector.load %arg6[%c2_35, %c0_36, %c0_37] : memref<4x1x6xf32, #tpu.memory_space<vmem>>, vector<1x1x6xf32>
    %53 = vector.shape_cast %52 : vector<1x1x6xf32> to vector<1x6xf32>
    %54 = vector.broadcast %53 : vector<1x6xf32> to vector<2x6xf32>
    %55 = arith.addf %51, %54 : vector<2x6xf32>
    %c3 = arith.constant 3 : index
    %c0_38 = arith.constant 0 : index
    %c0_39 = arith.constant 0 : index
    %56 = vector.load %arg5[%c3, %c0_38, %c0_39] : memref<4x32x6xf32, #tpu.memory_space<vmem>>, vector<1x32x6xf32>
    %57 = vector.shape_cast %56 : vector<1x32x6xf32> to vector<32x6xf32>
    %cst_40 = arith.constant dense<0.000000e+00> : vector<2x6xf32>
    %58 = tpu.matmul %34, %57, %cst_40 {dimension_numbers = #tpu.dot_dimension_numbers<[1], [0], [0], [1], [0, 0, 1, 1], [], []>} : vector<2x32xf32>, vector<32x6xf32>, vector<2x6xf32> -> vector<2x6xf32>
    %c3_41 = arith.constant 3 : index
    %c0_42 = arith.constant 0 : index
    %c0_43 = arith.constant 0 : index
    %59 = vector.load %arg6[%c3_41, %c0_42, %c0_43] : memref<4x1x6xf32, #tpu.memory_space<vmem>>, vector<1x1x6xf32>
    %60 = vector.shape_cast %59 : vector<1x1x6xf32> to vector<1x6xf32>
    %61 = vector.broadcast %60 : vector<1x6xf32> to vector<2x6xf32>
    %62 = arith.addf %58, %61 : vector<2x6xf32>
    %63 = math.exp %55 : vector<2x6xf32>
    %cst_44 = arith.constant 9.99999993E-9 : f32
    %64 = vector.broadcast %cst_44 : f32 to vector<2x6xf32>
    %65 = arith.addf %63, %64 : vector<2x6xf32>
    %cst_45 = arith.constant 1.000000e+00 : f32
    %66 = vector.broadcast %cst_45 : f32 to vector<2x6xf32>
    %67 = arith.divf %66, %65 : vector<2x6xf32>
    %68 = math.exp %62 : vector<2x6xf32>
    %cst_46 = arith.constant 9.99999993E-9 : f32
    %69 = vector.broadcast %cst_46 : f32 to vector<2x6xf32>
    %70 = arith.addf %68, %69 : vector<2x6xf32>
    %cst_47 = arith.constant 1.000000e+00 : f32
    %71 = vector.broadcast %cst_47 : f32 to vector<2x6xf32>
    %72 = arith.divf %71, %70 : vector<2x6xf32>
    %73 = arith.mulf %41, %67 : vector<2x6xf32>
    %74 = arith.mulf %48, %72 : vector<2x6xf32>
    %c0_48 = arith.constant 0 : index
    %c0_49 = arith.constant 0 : index
    %75 = vector.load %arg15[%c0_48, %c0_49] : memref<2x1xf32, #tpu.memory_space<vmem>>, vector<2x1xf32>
    %c0_50 = arith.constant 0 : index
    %c0_51 = arith.constant 0 : index
    %c0_52 = arith.constant 0 : index
    %76 = vector.load %arg13[%c0_50, %c0_51, %c0_52] : memref<4x2x2xf32, #tpu.memory_space<vmem>>, vector<1x2x2xf32>
    %77 = vector.shape_cast %76 : vector<1x2x2xf32> to vector<2x2xf32>
    %cst_53 = arith.constant dense<0.000000e+00> : vector<2x6xf32>
    %78 = tpu.matmul %77, %67, %cst_53 {dimension_numbers = #tpu.dot_dimension_numbers<[1], [0], [0], [1], [0, 0, 1, 1], [], []>} : vector<2x2xf32>, vector<2x6xf32>, vector<2x6xf32> -> vector<2x6xf32>
    %c1_54 = arith.constant 1 : index
    %c0_55 = arith.constant 0 : index
    %c0_56 = arith.constant 0 : index
    %79 = vector.load %arg13[%c1_54, %c0_55, %c0_56] : memref<4x2x2xf32, #tpu.memory_space<vmem>>, vector<1x2x2xf32>
    %80 = vector.shape_cast %79 : vector<1x2x2xf32> to vector<2x2xf32>
    %cst_57 = arith.constant dense<0.000000e+00> : vector<2x6xf32>
    %81 = tpu.matmul %80, %72, %cst_57 {dimension_numbers = #tpu.dot_dimension_numbers<[1], [0], [0], [1], [0, 0, 1, 1], [], []>} : vector<2x2xf32>, vector<2x6xf32>, vector<2x6xf32> -> vector<2x6xf32>
    %82 = arith.addf %78, %81 : vector<2x6xf32>
    %c0_58 = arith.constant 0 : index
    %c0_59 = arith.constant 0 : index
    %c0_60 = arith.constant 0 : index
    %83 = vector.load %arg14[%c0_58, %c0_59, %c0_60] : memref<2x2x1xf32, #tpu.memory_space<vmem>>, vector<1x2x1xf32>
    %84 = vector.shape_cast %83 : vector<1x2x1xf32> to vector<2x1xf32>
    %cst_61 = arith.constant 1.000000e+00 : f32
    %85 = vector.broadcast %cst_61 : f32 to vector<2x1xf32>
    %86 = arith.mulf %84, %85 : vector<2x1xf32>
    %87 = vector.broadcast %86 : vector<2x1xf32> to vector<2x6xf32>
    %88 = arith.addf %82, %87 : vector<2x6xf32>
    %c0_62 = arith.constant 0 : index
    %c0_63 = arith.constant 0 : index
    %c0_64 = arith.constant 0 : index
    %89 = vector.load %arg13[%c0_62, %c0_63, %c0_64] : memref<4x2x2xf32, #tpu.memory_space<vmem>>, vector<1x2x2xf32>
    %90 = vector.shape_cast %89 : vector<1x2x2xf32> to vector<2x2xf32>
    %cst_65 = arith.constant dense<0.000000e+00> : vector<2x6xf32>
    %91 = tpu.matmul %90, %73, %cst_65 {dimension_numbers = #tpu.dot_dimension_numbers<[1], [0], [0], [1], [0, 0, 1, 1], [], []>} : vector<2x2xf32>, vector<2x6xf32>, vector<2x6xf32> -> vector<2x6xf32>
    %c1_66 = arith.constant 1 : index
    %c0_67 = arith.constant 0 : index
    %c0_68 = arith.constant 0 : index
    %92 = vector.load %arg13[%c1_66, %c0_67, %c0_68] : memref<4x2x2xf32, #tpu.memory_space<vmem>>, vector<1x2x2xf32>
    %93 = vector.shape_cast %92 : vector<1x2x2xf32> to vector<2x2xf32>
    %cst_69 = arith.constant dense<0.000000e+00> : vector<2x6xf32>
    %94 = tpu.matmul %93, %74, %cst_69 {dimension_numbers = #tpu.dot_dimension_numbers<[1], [0], [0], [1], [0, 0, 1, 1], [], []>} : vector<2x2xf32>, vector<2x6xf32>, vector<2x6xf32> -> vector<2x6xf32>
    %95 = arith.addf %91, %94 : vector<2x6xf32>
    %cst_70 = arith.constant 1.000000e+00 : f32
    %96 = vector.broadcast %cst_70 : f32 to vector<2x6xf32>
    %97 = arith.divf %96, %88 : vector<2x6xf32>
    %98 = arith.mulf %95, %97 : vector<2x6xf32>
    %99 = math.log %97 : vector<2x6xf32>
    %c0_71 = arith.constant 0 : index
    %c0_72 = arith.constant 0 : index
    %c0_73 = arith.constant 0 : index
    %100 = vector.load %arg16[%c0_71, %c0_72, %c0_73] : memref<2x2x6xf32, #tpu.memory_space<vmem>>, vector<1x2x6xf32>
    %101 = vector.shape_cast %100 : vector<1x2x6xf32> to vector<2x6xf32>
    %102 = math.rsqrt %88 : vector<2x6xf32>
    %103 = arith.mulf %101, %102 : vector<2x6xf32>
    %104 = arith.addf %103, %98 : vector<2x6xf32>
    %cst_74 = arith.constant 5.000000e-01 : f32
    %105 = vector.broadcast %cst_74 : f32 to vector<2x6xf32>
    %106 = arith.mulf %105, %55 : vector<2x6xf32>
    %107 = math.exp %106 : vector<2x6xf32>
    %108 = arith.mulf %101, %107 : vector<2x6xf32>
    %109 = arith.addf %108, %41 : vector<2x6xf32>
    %110 = vector.broadcast %75 : vector<2x1xf32> to vector<2x6xf32>
    %111 = arith.mulf %110, %104 : vector<2x6xf32>
    %cst_75 = arith.constant 1.000000e+00 : f32
    %112 = vector.broadcast %cst_75 : f32 to vector<2x1xf32>
    %113 = arith.subf %112, %75 : vector<2x1xf32>
    %114 = vector.broadcast %113 : vector<2x1xf32> to vector<2x6xf32>
    %115 = arith.mulf %114, %109 : vector<2x6xf32>
    %116 = arith.addf %111, %115 : vector<2x6xf32>
    %c0_76 = arith.constant 0 : index
    %c0_77 = arith.constant 0 : index
    %117 = vector.load %arg7[%c0_76, %c0_77] : memref<6x32xf32, #tpu.memory_space<vmem>>, vector<6x32xf32>
    %cst_78 = arith.constant dense<0.000000e+00> : vector<2x32xf32>
    %118 = tpu.matmul %116, %117, %cst_78 {dimension_numbers = #tpu.dot_dimension_numbers<[1], [0], [0], [1], [0, 0, 1, 1], [], []>} : vector<2x6xf32>, vector<6x32xf32>, vector<2x32xf32> -> vector<2x32xf32>
    %c0_79 = arith.constant 0 : index
    %c0_80 = arith.constant 0 : index
    %119 = vector.load %arg8[%c0_79, %c0_80] : memref<1x32xf32, #tpu.memory_space<vmem>>, vector<1x32xf32>
    %120 = vector.broadcast %119 : vector<1x32xf32> to vector<2x32xf32>
    %121 = arith.addf %118, %120 : vector<2x32xf32>
    %122 = arith.negf %121 : vector<2x32xf32>
    %123 = math.exp %122 : vector<2x32xf32>
    %cst_81 = arith.constant 1.000000e+00 : f32
    %124 = vector.broadcast %cst_81 : f32 to vector<2x32xf32>
    %125 = arith.addf %124, %123 : vector<2x32xf32>
    %126 = arith.divf %124, %125 : vector<2x32xf32>
    %127 = arith.mulf %121, %126 : vector<2x32xf32>
    %c0_82 = arith.constant 0 : index
    %c0_83 = arith.constant 0 : index
    %128 = vector.load %arg9[%c0_82, %c0_83] : memref<32x32xf32, #tpu.memory_space<vmem>>, vector<32x32xf32>
    %cst_84 = arith.constant dense<0.000000e+00> : vector<2x32xf32>
    %129 = tpu.matmul %127, %128, %cst_84 {dimension_numbers = #tpu.dot_dimension_numbers<[1], [0], [0], [1], [0, 0, 1, 1], [], []>} : vector<2x32xf32>, vector<32x32xf32>, vector<2x32xf32> -> vector<2x32xf32>
    %c0_85 = arith.constant 0 : index
    %c0_86 = arith.constant 0 : index
    %130 = vector.load %arg10[%c0_85, %c0_86] : memref<1x32xf32, #tpu.memory_space<vmem>>, vector<1x32xf32>
    %131 = vector.broadcast %130 : vector<1x32xf32> to vector<2x32xf32>
    %132 = arith.addf %129, %131 : vector<2x32xf32>
    %133 = arith.negf %132 : vector<2x32xf32>
    %134 = math.exp %133 : vector<2x32xf32>
    %cst_87 = arith.constant 1.000000e+00 : f32
    %135 = vector.broadcast %cst_87 : f32 to vector<2x32xf32>
    %136 = arith.addf %135, %134 : vector<2x32xf32>
    %137 = arith.divf %135, %136 : vector<2x32xf32>
    %138 = arith.mulf %132, %137 : vector<2x32xf32>
    %c0_88 = arith.constant 0 : index
    %c0_89 = arith.constant 0 : index
    %139 = vector.load %arg11[%c0_88, %c0_89] : memref<32x8xf32, #tpu.memory_space<vmem>>, vector<32x8xf32>
    %cst_90 = arith.constant dense<0.000000e+00> : vector<2x8xf32>
    %140 = tpu.matmul %138, %139, %cst_90 {dimension_numbers = #tpu.dot_dimension_numbers<[1], [0], [0], [1], [0, 0, 1, 1], [], []>} : vector<2x32xf32>, vector<32x8xf32>, vector<2x8xf32> -> vector<2x8xf32>
    %c0_91 = arith.constant 0 : index
    %c0_92 = arith.constant 0 : index
    %141 = vector.load %arg12[%c0_91, %c0_92] : memref<1x8xf32, #tpu.memory_space<vmem>>, vector<1x8xf32>
    %142 = vector.broadcast %141 : vector<1x8xf32> to vector<2x8xf32>
    %143 = arith.addf %140, %142 : vector<2x8xf32>
    %c0_93 = arith.constant 0 : index
    %c0_94 = arith.constant 0 : index
    %c0_95 = arith.constant 0 : index
    %144 = vector.load %arg17[%c0_93, %c0_94, %c0_95] : memref<8x2x6xf32, #tpu.memory_space<vmem>>, vector<1x2x6xf32>
    %145 = vector.shape_cast %144 : vector<1x2x6xf32> to vector<2x6xf32>
    %146 = vector.shape_cast %41 : vector<2x6xf32> to vector<1x2x6xf32>
    tpu.vector_store %arg17[%c0_93, %c0_94, %c0_95], %146 {strides = array<i32>} : memref<8x2x6xf32, #tpu.memory_space<vmem>>, vector<1x2x6xf32>,
    %c2_96 = arith.constant 2 : index
    %c0_97 = arith.constant 0 : index
    %c0_98 = arith.constant 0 : index
    %147 = vector.load %arg17[%c2_96, %c0_97, %c0_98] : memref<8x2x6xf32, #tpu.memory_space<vmem>>, vector<1x2x6xf32>
    %148 = vector.shape_cast %147 : vector<1x2x6xf32> to vector<2x6xf32>
    %149 = vector.shape_cast %55 : vector<2x6xf32> to vector<1x2x6xf32>
    tpu.vector_store %arg17[%c2_96, %c0_97, %c0_98], %149 {strides = array<i32>} : memref<8x2x6xf32, #tpu.memory_space<vmem>>, vector<1x2x6xf32>,
    %c4 = arith.constant 4 : index
    %c0_99 = arith.constant 0 : index
    %c0_100 = arith.constant 0 : index
    %150 = vector.load %arg17[%c4, %c0_99, %c0_100] : memref<8x2x6xf32, #tpu.memory_space<vmem>>, vector<1x2x6xf32>
    %151 = vector.shape_cast %150 : vector<1x2x6xf32> to vector<2x6xf32>
    %152 = vector.shape_cast %98 : vector<2x6xf32> to vector<1x2x6xf32>
    tpu.vector_store %arg17[%c4, %c0_99, %c0_100], %152 {strides = array<i32>} : memref<8x2x6xf32, #tpu.memory_space<vmem>>, vector<1x2x6xf32>,
    %c6 = arith.constant 6 : index
    %c0_101 = arith.constant 0 : index
    %c0_102 = arith.constant 0 : index
    %153 = vector.load %arg17[%c6, %c0_101, %c0_102] : memref<8x2x6xf32, #tpu.memory_space<vmem>>, vector<1x2x6xf32>
    %154 = vector.shape_cast %153 : vector<1x2x6xf32> to vector<2x6xf32>
    %155 = vector.shape_cast %99 : vector<2x6xf32> to vector<1x2x6xf32>
    tpu.vector_store %arg17[%c6, %c0_101, %c0_102], %155 {strides = array<i32>} : memref<8x2x6xf32, #tpu.memory_space<vmem>>, vector<1x2x6xf32>,
    %c0_103 = arith.constant 0 : index
    %c0_104 = arith.constant 0 : index
    %c0_105 = arith.constant 0 : index
    %156 = vector.load %arg18[%c0_103, %c0_104, %c0_105] : memref<2x2x8xf32, #tpu.memory_space<vmem>>, vector<1x2x8xf32>
    %157 = vector.shape_cast %156 : vector<1x2x8xf32> to vector<2x8xf32>
    %158 = vector.shape_cast %143 : vector<2x8xf32> to vector<1x2x8xf32>
    tpu.vector_store %arg18[%c0_103, %c0_104, %c0_105], %158 {strides = array<i32>} : memref<2x2x8xf32, #tpu.memory_space<vmem>>, vector<1x2x8xf32>,
    %c2_106 = arith.constant 2 : index
    %c0_107 = arith.constant 0 : index
    %c0_108 = arith.constant 0 : index
    %159 = vector.load %arg13[%c2_106, %c0_107, %c0_108] : memref<4x2x2xf32, #tpu.memory_space<vmem>>, vector<1x2x2xf32>
    %160 = vector.shape_cast %159 : vector<1x2x2xf32> to vector<2x2xf32>
    %cst_109 = arith.constant dense<0.000000e+00> : vector<2x6xf32>
    %161 = tpu.matmul %160, %67, %cst_109 {dimension_numbers = #tpu.dot_dimension_numbers<[1], [0], [0], [1], [0, 0, 1, 1], [], []>} : vector<2x2xf32>, vector<2x6xf32>, vector<2x6xf32> -> vector<2x6xf32>
    %c3_110 = arith.constant 3 : index
    %c0_111 = arith.constant 0 : index
    %c0_112 = arith.constant 0 : index
    %162 = vector.load %arg13[%c3_110, %c0_111, %c0_112] : memref<4x2x2xf32, #tpu.memory_space<vmem>>, vector<1x2x2xf32>
    %163 = vector.shape_cast %162 : vector<1x2x2xf32> to vector<2x2xf32>
    %cst_113 = arith.constant dense<0.000000e+00> : vector<2x6xf32>
    %164 = tpu.matmul %163, %72, %cst_113 {dimension_numbers = #tpu.dot_dimension_numbers<[1], [0], [0], [1], [0, 0, 1, 1], [], []>} : vector<2x2xf32>, vector<2x6xf32>, vector<2x6xf32> -> vector<2x6xf32>
    %165 = arith.addf %161, %164 : vector<2x6xf32>
    %c1_114 = arith.constant 1 : index
    %c0_115 = arith.constant 0 : index
    %c0_116 = arith.constant 0 : index
    %166 = vector.load %arg14[%c1_114, %c0_115, %c0_116] : memref<2x2x1xf32, #tpu.memory_space<vmem>>, vector<1x2x1xf32>
    %167 = vector.shape_cast %166 : vector<1x2x1xf32> to vector<2x1xf32>
    %cst_117 = arith.constant 1.000000e+00 : f32
    %168 = vector.broadcast %cst_117 : f32 to vector<2x1xf32>
    %169 = arith.mulf %167, %168 : vector<2x1xf32>
    %170 = vector.broadcast %169 : vector<2x1xf32> to vector<2x6xf32>
    %171 = arith.addf %165, %170 : vector<2x6xf32>
    %c2_118 = arith.constant 2 : index
    %c0_119 = arith.constant 0 : index
    %c0_120 = arith.constant 0 : index
    %172 = vector.load %arg13[%c2_118, %c0_119, %c0_120] : memref<4x2x2xf32, #tpu.memory_space<vmem>>, vector<1x2x2xf32>
    %173 = vector.shape_cast %172 : vector<1x2x2xf32> to vector<2x2xf32>
    %cst_121 = arith.constant dense<0.000000e+00> : vector<2x6xf32>
    %174 = tpu.matmul %173, %73, %cst_121 {dimension_numbers = #tpu.dot_dimension_numbers<[1], [0], [0], [1], [0, 0, 1, 1], [], []>} : vector<2x2xf32>, vector<2x6xf32>, vector<2x6xf32> -> vector<2x6xf32>
    %c3_122 = arith.constant 3 : index
    %c0_123 = arith.constant 0 : index
    %c0_124 = arith.constant 0 : index
    %175 = vector.load %arg13[%c3_122, %c0_123, %c0_124] : memref<4x2x2xf32, #tpu.memory_space<vmem>>, vector<1x2x2xf32>
    %176 = vector.shape_cast %175 : vector<1x2x2xf32> to vector<2x2xf32>
    %cst_125 = arith.constant dense<0.000000e+00> : vector<2x6xf32>
    %177 = tpu.matmul %176, %74, %cst_125 {dimension_numbers = #tpu.dot_dimension_numbers<[1], [0], [0], [1], [0, 0, 1, 1], [], []>} : vector<2x2xf32>, vector<2x6xf32>, vector<2x6xf32> -> vector<2x6xf32>
    %178 = arith.addf %174, %177 : vector<2x6xf32>
    %cst_126 = arith.constant 1.000000e+00 : f32
    %179 = vector.broadcast %cst_126 : f32 to vector<2x6xf32>
    %180 = arith.divf %179, %171 : vector<2x6xf32>
    %181 = arith.mulf %178, %180 : vector<2x6xf32>
    %182 = math.log %180 : vector<2x6xf32>
    %c1_127 = arith.constant 1 : index
    %c0_128 = arith.constant 0 : index
    %c0_129 = arith.constant 0 : index
    %183 = vector.load %arg16[%c1_127, %c0_128, %c0_129] : memref<2x2x6xf32, #tpu.memory_space<vmem>>, vector<1x2x6xf32>
    %184 = vector.shape_cast %183 : vector<1x2x6xf32> to vector<2x6xf32>
    %185 = math.rsqrt %171 : vector<2x6xf32>
    %186 = arith.mulf %184, %185 : vector<2x6xf32>
    %187 = arith.addf %186, %181 : vector<2x6xf32>
    %cst_130 = arith.constant 5.000000e-01 : f32
    %188 = vector.broadcast %cst_130 : f32 to vector<2x6xf32>
    %189 = arith.mulf %188, %62 : vector<2x6xf32>
    %190 = math.exp %189 : vector<2x6xf32>
    %191 = arith.mulf %184, %190 : vector<2x6xf32>
    %192 = arith.addf %191, %48 : vector<2x6xf32>
    %193 = vector.broadcast %75 : vector<2x1xf32> to vector<2x6xf32>
    %194 = arith.mulf %193, %187 : vector<2x6xf32>
    %cst_131 = arith.constant 1.000000e+00 : f32
    %195 = vector.broadcast %cst_131 : f32 to vector<2x1xf32>
    %196 = arith.subf %195, %75 : vector<2x1xf32>
    %197 = vector.broadcast %196 : vector<2x1xf32> to vector<2x6xf32>
    %198 = arith.mulf %197, %192 : vector<2x6xf32>
    %199 = arith.addf %194, %198 : vector<2x6xf32>
    %c0_132 = arith.constant 0 : index
    %c0_133 = arith.constant 0 : index
    %200 = vector.load %arg7[%c0_132, %c0_133] : memref<6x32xf32, #tpu.memory_space<vmem>>, vector<6x32xf32>
    %cst_134 = arith.constant dense<0.000000e+00> : vector<2x32xf32>
    %201 = tpu.matmul %199, %200, %cst_134 {dimension_numbers = #tpu.dot_dimension_numbers<[1], [0], [0], [1], [0, 0, 1, 1], [], []>} : vector<2x6xf32>, vector<6x32xf32>, vector<2x32xf32> -> vector<2x32xf32>
    %c0_135 = arith.constant 0 : index
    %c0_136 = arith.constant 0 : index
    %202 = vector.load %arg8[%c0_135, %c0_136] : memref<1x32xf32, #tpu.memory_space<vmem>>, vector<1x32xf32>
    %203 = vector.broadcast %202 : vector<1x32xf32> to vector<2x32xf32>
    %204 = arith.addf %201, %203 : vector<2x32xf32>
    %205 = arith.negf %204 : vector<2x32xf32>
    %206 = math.exp %205 : vector<2x32xf32>
    %cst_137 = arith.constant 1.000000e+00 : f32
    %207 = vector.broadcast %cst_137 : f32 to vector<2x32xf32>
    %208 = arith.addf %207, %206 : vector<2x32xf32>
    %209 = arith.divf %207, %208 : vector<2x32xf32>
    %210 = arith.mulf %204, %209 : vector<2x32xf32>
    %c0_138 = arith.constant 0 : index
    %c0_139 = arith.constant 0 : index
    %211 = vector.load %arg9[%c0_138, %c0_139] : memref<32x32xf32, #tpu.memory_space<vmem>>, vector<32x32xf32>
    %cst_140 = arith.constant dense<0.000000e+00> : vector<2x32xf32>
    %212 = tpu.matmul %210, %211, %cst_140 {dimension_numbers = #tpu.dot_dimension_numbers<[1], [0], [0], [1], [0, 0, 1, 1], [], []>} : vector<2x32xf32>, vector<32x32xf32>, vector<2x32xf32> -> vector<2x32xf32>
    %c0_141 = arith.constant 0 : index
    %c0_142 = arith.constant 0 : index
    %213 = vector.load %arg10[%c0_141, %c0_142] : memref<1x32xf32, #tpu.memory_space<vmem>>, vector<1x32xf32>
    %214 = vector.broadcast %213 : vector<1x32xf32> to vector<2x32xf32>
    %215 = arith.addf %212, %214 : vector<2x32xf32>
    %216 = arith.negf %215 : vector<2x32xf32>
    %217 = math.exp %216 : vector<2x32xf32>
    %cst_143 = arith.constant 1.000000e+00 : f32
    %218 = vector.broadcast %cst_143 : f32 to vector<2x32xf32>
    %219 = arith.addf %218, %217 : vector<2x32xf32>
    %220 = arith.divf %218, %219 : vector<2x32xf32>
    %221 = arith.mulf %215, %220 : vector<2x32xf32>
    %c0_144 = arith.constant 0 : index
    %c0_145 = arith.constant 0 : index
    %222 = vector.load %arg11[%c0_144, %c0_145] : memref<32x8xf32, #tpu.memory_space<vmem>>, vector<32x8xf32>
    %cst_146 = arith.constant dense<0.000000e+00> : vector<2x8xf32>
    %223 = tpu.matmul %221, %222, %cst_146 {dimension_numbers = #tpu.dot_dimension_numbers<[1], [0], [0], [1], [0, 0, 1, 1], [], []>} : vector<2x32xf32>, vector<32x8xf32>, vector<2x8xf32> -> vector<2x8xf32>
    %c0_147 = arith.constant 0 : index
    %c0_148 = arith.constant 0 : index
    %224 = vector.load %arg12[%c0_147, %c0_148] : memref<1x8xf32, #tpu.memory_space<vmem>>, vector<1x8xf32>
    %225 = vector.broadcast %224 : vector<1x8xf32> to vector<2x8xf32>
    %226 = arith.addf %223, %225 : vector<2x8xf32>
    %c1_149 = arith.constant 1 : index
    %c0_150 = arith.constant 0 : index
    %c0_151 = arith.constant 0 : index
    %227 = vector.load %arg17[%c1_149, %c0_150, %c0_151] : memref<8x2x6xf32, #tpu.memory_space<vmem>>, vector<1x2x6xf32>
    %228 = vector.shape_cast %227 : vector<1x2x6xf32> to vector<2x6xf32>
    %229 = vector.shape_cast %48 : vector<2x6xf32> to vector<1x2x6xf32>
    tpu.vector_store %arg17[%c1_149, %c0_150, %c0_151], %229 {strides = array<i32>} : memref<8x2x6xf32, #tpu.memory_space<vmem>>, vector<1x2x6xf32>,
    %c3_152 = arith.constant 3 : index
    %c0_153 = arith.constant 0 : index
    %c0_154 = arith.constant 0 : index
    %230 = vector.load %arg17[%c3_152, %c0_153, %c0_154] : memref<8x2x6xf32, #tpu.memory_space<vmem>>, vector<1x2x6xf32>
    %231 = vector.shape_cast %230 : vector<1x2x6xf32> to vector<2x6xf32>
    %232 = vector.shape_cast %62 : vector<2x6xf32> to vector<1x2x6xf32>
    tpu.vector_store %arg17[%c3_152, %c0_153, %c0_154], %232 {strides = array<i32>} : memref<8x2x6xf32, #tpu.memory_space<vmem>>, vector<1x2x6xf32>,
    %c5 = arith.constant 5 : index
    %c0_155 = arith.constant 0 : index
    %c0_156 = arith.constant 0 : index
    %233 = vector.load %arg17[%c5, %c0_155, %c0_156] : memref<8x2x6xf32, #tpu.memory_space<vmem>>, vector<1x2x6xf32>
    %234 = vector.shape_cast %233 : vector<1x2x6xf32> to vector<2x6xf32>
    %235 = vector.shape_cast %181 : vector<2x6xf32> to vector<1x2x6xf32>
    tpu.vector_store %arg17[%c5, %c0_155, %c0_156], %235 {strides = array<i32>} : memref<8x2x6xf32, #tpu.memory_space<vmem>>, vector<1x2x6xf32>,
    %c7 = arith.constant 7 : index
    %c0_157 = arith.constant 0 : index
    %c0_158 = arith.constant 0 : index
    %236 = vector.load %arg17[%c7, %c0_157, %c0_158] : memref<8x2x6xf32, #tpu.memory_space<vmem>>, vector<1x2x6xf32>
    %237 = vector.shape_cast %236 : vector<1x2x6xf32> to vector<2x6xf32>
    %238 = vector.shape_cast %182 : vector<2x6xf32> to vector<1x2x6xf32>
    tpu.vector_store %arg17[%c7, %c0_157, %c0_158], %238 {strides = array<i32>} : memref<8x2x6xf32, #tpu.memory_space<vmem>>, vector<1x2x6xf32>,
    %c1_159 = arith.constant 1 : index
    %c0_160 = arith.constant 0 : index
    %c0_161 = arith.constant 0 : index
    %239 = vector.load %arg18[%c1_159, %c0_160, %c0_161] : memref<2x2x8xf32, #tpu.memory_space<vmem>>, vector<1x2x8xf32>
    %240 = vector.shape_cast %239 : vector<1x2x8xf32> to vector<2x8xf32>
    %241 = vector.shape_cast %226 : vector<2x8xf32> to vector<1x2x8xf32>
    tpu.vector_store %arg18[%c1_159, %c0_160, %c0_161], %241 {strides = array<i32>} : memref<2x2x8xf32, #tpu.memory_space<vmem>>, vector<1x2x8xf32>,
    return
  }
}

</mosaic_0001>

<llo_original>
// kernel: tpu_custom_call.1
$region0: #{tpu_custom_call.1}
  #allocation0 [shape = 'u32[]', space=smem, size = 0x4, offset = 0x4, fixed_abs, tag = 'smem constant byte address 0x4 - core index']
  #allocation1 [shape = 'u32[144,128]{1,0:T(1,128)}', space=vmem, size = 0x12000, scoped, tag = 'internal scratch']
  %s0 = inlined_call_operand.vmem [shape: f32[2,2,1], index: 0, kind: input, shape index: {}]
  %s1 = inlined_call_operand.vmem [shape: f32[2,1,32], index: 1, kind: input, shape index: {}]
  %s2 = inlined_call_operand.vmem [shape: f32[1,32], index: 2, kind: input, shape index: {}]
  %s3 = inlined_call_operand.vmem [shape: f32[32,32], index: 3, kind: input, shape index: {}]
  %s4 = inlined_call_operand.vmem [shape: f32[1,32], index: 4, kind: input, shape index: {}]
  %s5 = inlined_call_operand.vmem [shape: f32[4,32,6], index: 5, kind: input, shape index: {}]
  %s6 = inlined_call_operand.vmem [shape: f32[4,1,6], index: 6, kind: input, shape index: {}]
  %s7 = inlined_call_operand.vmem [shape: f32[6,32], index: 7, kind: input, shape index: {}]
  %s8 = inlined_call_operand.vmem [shape: f32[1,32], index: 8, kind: input, shape index: {}]
  %s9 = inlined_call_operand.vmem [shape: f32[32,32], index: 9, kind: input, shape index: {}]
  %s10 = inlined_call_operand.vmem [shape: f32[1,32], index: 10, kind: input, shape index: {}]
  %s11 = inlined_call_operand.vmem [shape: f32[32,8], index: 11, kind: input, shape index: {}]
  %s12 = inlined_call_operand.vmem [shape: f32[1,8], index: 12, kind: input, shape index: {}]
  %s13 = inlined_call_operand.vmem [shape: f32[4,2,2], index: 13, kind: input, shape index: {}]
  %s14 = inlined_call_operand.vmem [shape: f32[2,2,1], index: 14, kind: input, shape index: {}]
  %s15 = inlined_call_operand.vmem [shape: f32[2,1], index: 15, kind: input, shape index: {}]
  %s16 = inlined_call_operand.vmem [shape: f32[2,2,6], index: 16, kind: input, shape index: {}]
  %s17 = inlined_call_operand.vmem [shape: f32[8,2,6], index: 17, kind: output, shape index: {0}]
  %s18 = inlined_call_operand.hbm [shape: f32[2,2,8], index: 18, kind: output, shape index: {1}]
  %19 = xla_tuple %s17, %s18
  %s20 = sld [smem:[#allocation0]]
  $region86: #{tpu_custom_call.1} parent=0
    _
  %s22 = ssub.s32 1, %s20
  %s23 = scalar_select 0, %s22, %s20
  $region1: #{tpu_custom_call.1} parent=0
    #allocation2 [shape = 'u8[2048]{0}', space=vmem, size = 0x800, scoped, tag = 'output window, operand 1, single buffered']
    #allocation3 [shape = 's32[1]{0}', space=sflag, size = 0x4, scoped, tag = 'scoped memory for tpu_custom_call.1']
    %24 = vsyncpa [#allocation3], 0
    // Predicated region
    $region2: #{tpu_custom_call.1} parent=1 // pred_check
      _
    $region3: #{tpu_custom_call.1} parent=1 // pred_check_branch
      %26 = sbr.rel (0) target = $region5
    $region4: #{tpu_custom_call.1} parent=1 // pred_region
      _
    $region5: #{tpu_custom_call.1} parent=1 // pred_fallthru
      _
    // Predicated region
    $region6: #{tpu_custom_call.1} parent=1 // pred_check
      _
    $region7: #{tpu_custom_call.1} parent=1 // pred_check_branch
      %28 = sbr.rel (0) target = $region9
    $region8: #{tpu_custom_call.1} parent=1 // pred_region
      _
    $region9: #{tpu_custom_call.1} parent=1 // pred_fallthru
      _
    // Predicated region
    $region10: #{tpu_custom_call.1} parent=1 // pred_check
      _
    $region11: #{tpu_custom_call.1} parent=1 // pred_check_branch
      %30 = sbr.rel (0) target = $region13
    $region12: #{tpu_custom_call.1} parent=1 // pred_region
      _
    $region13: #{tpu_custom_call.1} parent=1 // pred_fallthru
      _
    // Predicated region
    $region14: #{tpu_custom_call.1} parent=1 // pred_check
      _
    $region15: #{tpu_custom_call.1} parent=1 // pred_check_branch
      %32 = sbr.rel (0) target = $region17
    $region16: #{tpu_custom_call.1} parent=1 // pred_region
      _
    $region17: #{tpu_custom_call.1} parent=1 // pred_fallthru
      _
    // Predicated region
    $region18: #{tpu_custom_call.1} parent=1 // pred_check
      _
    $region19: #{tpu_custom_call.1} parent=1 // pred_check_branch
      %34 = sbr.rel (0) target = $region21
    $region20: #{tpu_custom_call.1} parent=1 // pred_region
      _
    $region21: #{tpu_custom_call.1} parent=1 // pred_fallthru
      _
    // Predicated region
    $region22: #{tpu_custom_call.1} parent=1 // pred_check
      _
    $region23: #{tpu_custom_call.1} parent=1 // pred_check_branch
      %36 = sbr.rel (0) target = $region25
    $region24: #{tpu_custom_call.1} parent=1 // pred_region
      _
    $region25: #{tpu_custom_call.1} parent=1 // pred_fallthru
      _
    // Predicated region
    $region26: #{tpu_custom_call.1} parent=1 // pred_check
      _
    $region27: #{tpu_custom_call.1} parent=1 // pred_check_branch
      %38 = sbr.rel (0) target = $region29
    $region28: #{tpu_custom_call.1} parent=1 // pred_region
      _
    $region29: #{tpu_custom_call.1} parent=1 // pred_fallthru
      _
    // Predicated region
    $region30: #{tpu_custom_call.1} parent=1 // pred_check
      _
    $region31: #{tpu_custom_call.1} parent=1 // pred_check_branch
      %40 = sbr.rel (0) target = $region33
    $region32: #{tpu_custom_call.1} parent=1 // pred_region
      _
    $region33: #{tpu_custom_call.1} parent=1 // pred_fallthru
      _
    // Predicated region
    $region34: #{tpu_custom_call.1} parent=1 // pred_check
      _
    $region35: #{tpu_custom_call.1} parent=1 // pred_check_branch
      %42 = sbr.rel (0) target = $region37
    $region36: #{tpu_custom_call.1} parent=1 // pred_region
      _
    $region37: #{tpu_custom_call.1} parent=1 // pred_fallthru
      _
    // Predicated region
    $region38: #{tpu_custom_call.1} parent=1 // pred_check
      _
    $region39: #{tpu_custom_call.1} parent=1 // pred_check_branch
      %44 = sbr.rel (0) target = $region41
    $region40: #{tpu_custom_call.1} parent=1 // pred_region
      _
    $region41: #{tpu_custom_call.1} parent=1 // pred_fallthru
      _
    // Predicated region
    $region42: #{tpu_custom_call.1} parent=1 // pred_check
      _
    $region43: #{tpu_custom_call.1} parent=1 // pred_check_branch
      %46 = sbr.rel (0) target = $region45
    $region44: #{tpu_custom_call.1} parent=1 // pred_region
      _
    $region45: #{tpu_custom_call.1} parent=1 // pred_fallthru
      _
    // Predicated region
    $region46: #{tpu_custom_call.1} parent=1 // pred_check
      _
    $region47: #{tpu_custom_call.1} parent=1 // pred_check_branch
      %48 = sbr.rel (0) target = $region49
    $region48: #{tpu_custom_call.1} parent=1 // pred_region
      _
    $region49: #{tpu_custom_call.1} parent=1 // pred_fallthru
      _
    // Predicated region
    $region50: #{tpu_custom_call.1} parent=1 // pred_check
      _
    $region51: #{tpu_custom_call.1} parent=1 // pred_check_branch
      %50 = sbr.rel (0) target = $region53
    $region52: #{tpu_custom_call.1} parent=1 // pred_region
      _
    $region53: #{tpu_custom_call.1} parent=1 // pred_fallthru
      _
    // Predicated region
    $region54: #{tpu_custom_call.1} parent=1 // pred_check
      _
    $region55: #{tpu_custom_call.1} parent=1 // pred_check_branch
      %52 = sbr.rel (0) target = $region57
    $region56: #{tpu_custom_call.1} parent=1 // pred_region
      _
    $region57: #{tpu_custom_call.1} parent=1 // pred_fallthru
      _
    // Predicated region
    $region58: #{tpu_custom_call.1} parent=1 // pred_check
      _
    $region59: #{tpu_custom_call.1} parent=1 // pred_check_branch
      %54 = sbr.rel (0) target = $region61
    $region60: #{tpu_custom_call.1} parent=1 // pred_region
      _
    $region61: #{tpu_custom_call.1} parent=1 // pred_fallthru
      _
    // Predicated region
    $region62: #{tpu_custom_call.1} parent=1 // pred_check
      _
    $region63: #{tpu_custom_call.1} parent=1 // pred_check_branch
      %56 = sbr.rel (0) target = $region65
    $region64: #{tpu_custom_call.1} parent=1 // pred_region
      _
    $region65: #{tpu_custom_call.1} parent=1 // pred_fallthru
      _
    // Predicated region
    $region66: #{tpu_custom_call.1} parent=1 // pred_check
      _
    $region67: #{tpu_custom_call.1} parent=1 // pred_check_branch
      %58 = sbr.rel (0) target = $region69
    $region68: #{tpu_custom_call.1} parent=1 // pred_region
      _
    $region69: #{tpu_custom_call.1} parent=1 // pred_fallthru
      _
    %v59 = vld [vmem:[%s0] sm:$0x3]
    %v60 = vld [vmem:[%s1] sm:$0x1]
    %62 = vset.pattern.permute.xlu0 0
    %63 = vperm.xlu0 %62, %v59
    %v64 = vpop.permute.xlu0 %63
    %v67 = vlaneseq
    %v68 = vshrl.u32 %v67, 7
    %v69 = vsub.s32 0, %v68
    %v70 = vrot.slane %v60, %v69
    %v72 = vmul.f32 %v64, %v70
    %s73 = scalar_lea.vmem %s0, 2
    %v74 = vld [vmem:[%s73] sm:$0x3]
    %s75 = scalar_lea.vmem %s1, 1
    %v76 = vld [vmem:[%s75] sm:$0x1]
    %78 = vset.pattern.permute.xlu0 0
    %79 = vperm.xlu0 %78, %v74
    %v80 = vpop.permute.xlu0 %79
    %v83 = vlaneseq
    %v84 = vshrl.u32 %v83, 7
    %v85 = vsub.s32 0, %v84
    %v86 = vrot.slane %v76, %v85
    %v88 = vmul.f32 %v80, %v86
    %v89 = vadd.f32 %v72, %v88
    %v90 = vld [vmem:[%s2] sm:$0x1]
    %v92 = vlaneseq
    %v93 = vshrl.u32 %v92, 7
    %v94 = vsub.s32 0, %v93
    %v95 = vrot.slane %v90, %v94
    %v97 = vadd.f32 %v89, %v95
    %v98 = vxor.u32 %v97, 2147483648
    %v99 = vmul.f32 %v98, 1.442695
    %v100 = vpow.pop %v99
    %v101 = vadd.f32 %v100, 1.0
    %v102 = vrcp.pop %v101
    %v103 = vmul.f32 1.0, %v102
    %v104 = vmul.f32 %v97, %v103
    %v105 = vld [vmem:[%s3] sm:$0xff]
    %v106 = vld [vmem:[%s3 + $0x8] sm:$0xff]
    %v107 = vld [vmem:[%s3 + $0x10] sm:$0xff]
    %v108 = vld [vmem:[%s3 + $0x18] sm:$0xff]
    %v109 = vld [vmem:[%s4] sm:$0x1]
    %v111 = vlaneseq
    %v112 = vshrl.u32 %v111, 7
    %v113 = vsub.s32 0, %v112
    %v114 = vrot.slane %v109, %v113
    %vm116 = vcmask 261120
    %v118 = vsel %vm116, %v104, 0
    %120 = vmatprep.subr.mxu0 0.0
    %121 = vmatpush1.msra.mxu0 0.0
    %122 = vmatprep.subr.mxu0 0.0
    %123 = vmatpush1.msra.mxu0 0.0
    %124 = vmatprep.subr.mxu0 0.0
    %125 = vmatpush1.msra.mxu0 0.0
    %126 = vmatprep.subr.mxu0 0.0
    %127 = vmatpush1.msra.mxu0 0.0
    %128 = vmatprep.subr.mxu0 0.0
    %129 = vmatpush1.msra.mxu0 0.0
    %130 = vmatprep.subr.mxu0 0.0
    %131 = vmatpush1.msra.mxu0 0.0
    %132 = vmatprep.subr.mxu0 0.0
    %133 = vmatpush1.msra.mxu0 0.0
    %134 = vmatprep.subr.mxu0 0.0
    %135 = vmatpush1.msra.mxu0 0.0
    %136 = vmatprep.subr.mxu0 0.0
    %137 = vmatpush1.msra.mxu0 0.0
    %138 = vmatprep.subr.mxu0 0.0
    %139 = vmatpush1.msra.mxu0 0.0
    %140 = vmatprep.subr.mxu0 0.0
    %141 = vmatpush1.msra.mxu0 0.0
    %142 = vmatprep.subr.mxu0 0.0
    %143 = vmatpush1.msra.mxu0 0.0
    %144 = vmatprep.subr.mxu0 0.0
    %145 = vmatpush1.msra.mxu0 %v108
    %146 = vmatprep.subr.mxu0 0.0
    %147 = vmatpush1.msra.mxu0 %v107
    %148 = vmatprep.subr.mxu0 0.0
    %149 = vmatpush1.msra.mxu0 %v106
    %150 = vmatprep.subr.mxu0 0.0
    %151 = vmatpush1.msra.mxu0 %v105
    %152 = vmatprep.subr.mxu0 0.0
    %153 = vmatpush2.msra.mxu0 0.0
    %154 = vmatprep.subr.mxu0 0.0
    %155 = vmatpush2.msra.mxu0 0.0
    %156 = vmatprep.subr.mxu0 0.0
    %157 = vmatpush2.msra.mxu0 0.0
    %158 = vmatprep.subr.mxu0 0.0
    %159 = vmatpush2.msra.mxu0 0.0
    %160 = vmatprep.subr.mxu0 0.0
    %161 = vmatpush2.msra.mxu0 0.0
    %162 = vmatprep.subr.mxu0 0.0
    %163 = vmatpush2.msra.mxu0 0.0
    %164 = vmatprep.subr.mxu0 0.0
    %165 = vmatpush2.msra.mxu0 0.0
    %166 = vmatprep.subr.mxu0 0.0
    %167 = vmatpush2.msra.mxu0 0.0
    %168 = vmatprep.subr.mxu0 0.0
    %169 = vmatpush2.msra.mxu0 0.0
    %170 = vmatprep.subr.mxu0 0.0
    %171 = vmatpush2.msra.mxu0 0.0
    %172 = vmatprep.subr.mxu0 0.0
    %173 = vmatpush2.msra.mxu0 0.0
    %174 = vmatprep.subr.mxu0 0.0
    %175 = vmatpush2.msra.mxu0 0.0
    %176 = vmatprep.subr.mxu0 0.0
    %177 = vmatpush2.msra.mxu0 0.0
    %178 = vmatprep.subr.mxu0 0.0
    %179 = vmatpush2.msra.mxu0 0.0
    %180 = vmatprep.subr.mxu0 0.0
    %181 = vmatpush2.msra.mxu0 0.0
    %182 = vmatprep.subr.mxu0 0.0
    %183 = vmatpush2.msra.mxu0 0.0
    %184 = vmatprep.mubr.f32.mxu0 0.0
    %185 = vmatmul.mubr.f32.gmra.mxu0 %v118
    %v186 = vpop.f32.mrf.mxu0
    %v187 = vadd.f32 %v114, %v186
    %v188 = vpop.f32.mrf.mxu0
    %189 = vdwg.mxu0
    %v190 = vxor.u32 %v187, 2147483648
    %v191 = vmul.f32 %v190, 1.442695
    %v192 = vpow.pop %v191
    %v193 = vadd.f32 %v192, 1.0
    %v194 = vrcp.pop %v193
    %v195 = vmul.f32 1.0, %v194
    %v196 = vmul.f32 %v187, %v195
    %v197 = vld [vmem:[%s5] sm:$0xff]
    %v198 = vld [vmem:[%s5 + $0x8] sm:$0xff]
    %v199 = vld [vmem:[%s5 + $0x10] sm:$0xff]
    %v200 = vld [vmem:[%s5 + $0x18] sm:$0xff]
    %v201 = vld [vmem:[%s6] sm:$0x1]
    %v203 = vlaneseq
    %v204 = vshrl.u32 %v203, 7
    %v205 = vsub.s32 0, %v204
    %v206 = vrot.slane %v201, %v205
    %v209 = vsel %vm116, %v196, 0
    %211 = vmatprep.subr.mxu0 0.0
    %212 = vmatpush1.msra.mxu0 0.0
    %213 = vmatprep.subr.mxu0 0.0
    %214 = vmatpush1.msra.mxu0 0.0
    %215 = vmatprep.subr.mxu0 0.0
    %216 = vmatpush1.msra.mxu0 0.0
    %217 = vmatprep.subr.mxu0 0.0
    %218 = vmatpush1.msra.mxu0 0.0
    %219 = vmatprep.subr.mxu0 0.0
    %220 = vmatpush1.msra.mxu0 0.0
    %221 = vmatprep.subr.mxu0 0.0
    %222 = vmatpush1.msra.mxu0 0.0
    %223 = vmatprep.subr.mxu0 0.0
    %224 = vmatpush1.msra.mxu0 0.0
    %225 = vmatprep.subr.mxu0 0.0
    %226 = vmatpush1.msra.mxu0 0.0
    %227 = vmatprep.subr.mxu0 0.0
    %228 = vmatpush1.msra.mxu0 0.0
    %229 = vmatprep.subr.mxu0 0.0
    %230 = vmatpush1.msra.mxu0 0.0
    %231 = vmatprep.subr.mxu0 0.0
    %232 = vmatpush1.msra.mxu0 0.0
    %233 = vmatprep.subr.mxu0 0.0
    %234 = vmatpush1.msra.mxu0 0.0
    %235 = vmatprep.subr.mxu0 0.0
    %236 = vmatpush1.msra.mxu0 %v200
    %237 = vmatprep.subr.mxu0 0.0
    %238 = vmatpush1.msra.mxu0 %v199
    %239 = vmatprep.subr.mxu0 0.0
    %240 = vmatpush1.msra.mxu0 %v198
    %241 = vmatprep.subr.mxu0 0.0
    %242 = vmatpush1.msra.mxu0 %v197
    %243 = vmatprep.subr.mxu0 0.0
    %244 = vmatpush2.msra.mxu0 0.0
    %245 = vmatprep.subr.mxu0 0.0
    %246 = vmatpush2.msra.mxu0 0.0
    %247 = vmatprep.subr.mxu0 0.0
    %248 = vmatpush2.msra.mxu0 0.0
    %249 = vmatprep.subr.mxu0 0.0
    %250 = vmatpush2.msra.mxu0 0.0
    %251 = vmatprep.subr.mxu0 0.0
    %252 = vmatpush2.msra.mxu0 0.0
    %253 = vmatprep.subr.mxu0 0.0
    %254 = vmatpush2.msra.mxu0 0.0
    %255 = vmatprep.subr.mxu0 0.0
    %256 = vmatpush2.msra.mxu0 0.0
    %257 = vmatprep.subr.mxu0 0.0
    %258 = vmatpush2.msra.mxu0 0.0
    %259 = vmatprep.subr.mxu0 0.0
    %260 = vmatpush2.msra.mxu0 0.0
    %261 = vmatprep.subr.mxu0 0.0
    %262 = vmatpush2.msra.mxu0 0.0
    %263 = vmatprep.subr.mxu0 0.0
    %264 = vmatpush2.msra.mxu0 0.0
    %265 = vmatprep.subr.mxu0 0.0
    %266 = vmatpush2.msra.mxu0 0.0
    %267 = vmatprep.subr.mxu0 0.0
    %268 = vmatpush2.msra.mxu0 0.0
    %269 = vmatprep.subr.mxu0 0.0
    %270 = vmatpush2.msra.mxu0 0.0
    %271 = vmatprep.subr.mxu0 0.0
    %272 = vmatpush2.msra.mxu0 0.0
    %273 = vmatprep.subr.mxu0 0.0
    %274 = vmatpush2.msra.mxu0 0.0
    %275 = vmatprep.mubr.f32.mxu0 0.0
    %276 = vmatmul.mubr.f32.gmra.mxu0 %v209
    %v277 = vpop.f32.mrf.mxu0
    %v278 = vadd.f32 %v206, %v277
    %v279 = vpop.f32.mrf.mxu0
    %280 = vdwg.mxu0
    %s281 = scalar_lea.vmem %s5, 32
    %v282 = vld [vmem:[%s281] sm:$0xff]
    %v283 = vld [vmem:[%s281 + $0x8] sm:$0xff]
    %v284 = vld [vmem:[%s281 + $0x10] sm:$0xff]
    %v285 = vld [vmem:[%s281 + $0x18] sm:$0xff]
    %s286 = scalar_lea.vmem %s6, 1
    %v287 = vld [vmem:[%s286] sm:$0x1]
    %v289 = vlaneseq
    %v290 = vshrl.u32 %v289, 7
    %v291 = vsub.s32 0, %v290
    %v292 = vrot.slane %v287, %v291
    %294 = vmatprep.subr.mxu0 0.0
    %295 = vmatpush1.msra.mxu0 0.0
    %296 = vmatprep.subr.mxu0 0.0
    %297 = vmatpush1.msra.mxu0 0.0
    %298 = vmatprep.subr.mxu0 0.0
    %299 = vmatpush1.msra.mxu0 0.0
    %300 = vmatprep.subr.mxu0 0.0
    %301 = vmatpush1.msra.mxu0 0.0
    %302 = vmatprep.subr.mxu0 0.0
    %303 = vmatpush1.msra.mxu0 0.0
    %304 = vmatprep.subr.mxu0 0.0
    %305 = vmatpush1.msra.mxu0 0.0
    %306 = vmatprep.subr.mxu0 0.0
    %307 = vmatpush1.msra.mxu0 0.0
    %308 = vmatprep.subr.mxu0 0.0
    %309 = vmatpush1.msra.mxu0 0.0
    %310 = vmatprep.subr.mxu0 0.0
    %311 = vmatpush1.msra.mxu0 0.0
    %312 = vmatprep.subr.mxu0 0.0
    %313 = vmatpush1.msra.mxu0 0.0
    %314 = vmatprep.subr.mxu0 0.0
    %315 = vmatpush1.msra.mxu0 0.0
    %316 = vmatprep.subr.mxu0 0.0
    %317 = vmatpush1.msra.mxu0 0.0
    %318 = vmatprep.subr.mxu0 0.0
    %319 = vmatpush1.msra.mxu0 %v285
    %320 = vmatprep.subr.mxu0 0.0
    %321 = vmatpush1.msra.mxu0 %v284
    %322 = vmatprep.subr.mxu0 0.0
    %323 = vmatpush1.msra.mxu0 %v283
    %324 = vmatprep.subr.mxu0 0.0
    %325 = vmatpush1.msra.mxu0 %v282
    %326 = vmatprep.subr.mxu0 0.0
    %327 = vmatpush2.msra.mxu0 0.0
    %328 = vmatprep.subr.mxu0 0.0
    %329 = vmatpush2.msra.mxu0 0.0
    %330 = vmatprep.subr.mxu0 0.0
    %331 = vmatpush2.msra.mxu0 0.0
    %332 = vmatprep.subr.mxu0 0.0
    %333 = vmatpush2.msra.mxu0 0.0
    %334 = vmatprep.subr.mxu0 0.0
    %335 = vmatpush2.msra.mxu0 0.0
    %336 = vmatprep.subr.mxu0 0.0
    %337 = vmatpush2.msra.mxu0 0.0
    %338 = vmatprep.subr.mxu0 0.0
    %339 = vmatpush2.msra.mxu0 0.0
    %340 = vmatprep.subr.mxu0 0.0
    %341 = vmatpush2.msra.mxu0 0.0
    %342 = vmatprep.subr.mxu0 0.0
    %343 = vmatpush2.msra.mxu0 0.0
    %344 = vmatprep.subr.mxu0 0.0
    %345 = vmatpush2.msra.mxu0 0.0
    %346 = vmatprep.subr.mxu0 0.0
    %347 = vmatpush2.msra.mxu0 0.0
    %348 = vmatprep.subr.mxu0 0.0
    %349 = vmatpush2.msra.mxu0 0.0
    %350 = vmatprep.subr.mxu0 0.0
    %351 = vmatpush2.msra.mxu0 0.0
    %352 = vmatprep.subr.mxu0 0.0
    %353 = vmatpush2.msra.mxu0 0.0
    %354 = vmatprep.subr.mxu0 0.0
    %355 = vmatpush2.msra.mxu0 0.0
    %356 = vmatprep.subr.mxu0 0.0
    %357 = vmatpush2.msra.mxu0 0.0
    %358 = vmatprep.mubr.f32.mxu0 0.0
    %359 = vmatmul.mubr.f32.gmra.mxu0 %v209
    %v360 = vpop.f32.mrf.mxu0
    %v361 = vadd.f32 %v292, %v360
    %v362 = vpop.f32.mrf.mxu0
    %363 = vdwg.mxu0
    %s364 = scalar_lea.vmem %s5, 64
    %v365 = vld [vmem:[%s364] sm:$0xff]
    %v366 = vld [vmem:[%s364 + $0x8] sm:$0xff]
    %v367 = vld [vmem:[%s364 + $0x10] sm:$0xff]
    %v368 = vld [vmem:[%s364 + $0x18] sm:$0xff]
    %s369 = scalar_lea.vmem %s6, 2
    %v370 = vld [vmem:[%s369] sm:$0x1]
    %v372 = vlaneseq
    %v373 = vshrl.u32 %v372, 7
    %v374 = vsub.s32 0, %v373
    %v375 = vrot.slane %v370, %v374
    %377 = vmatprep.subr.mxu0 0.0
    %378 = vmatpush1.msra.mxu0 0.0
    %379 = vmatprep.subr.mxu0 0.0
    %380 = vmatpush1.msra.mxu0 0.0
    %381 = vmatprep.subr.mxu0 0.0
    %382 = vmatpush1.msra.mxu0 0.0
    %383 = vmatprep.subr.mxu0 0.0
    %384 = vmatpush1.msra.mxu0 0.0
    %385 = vmatprep.subr.mxu0 0.0
    %386 = vmatpush1.msra.mxu0 0.0
    %387 = vmatprep.subr.mxu0 0.0
    %388 = vmatpush1.msra.mxu0 0.0
    %389 = vmatprep.subr.mxu0 0.0
    %390 = vmatpush1.msra.mxu0 0.0
    %391 = vmatprep.subr.mxu0 0.0
    %392 = vmatpush1.msra.mxu0 0.0
    %393 = vmatprep.subr.mxu0 0.0
    %394 = vmatpush1.msra.mxu0 0.0
    %395 = vmatprep.subr.mxu0 0.0
    %396 = vmatpush1.msra.mxu0 0.0
    %397 = vmatprep.subr.mxu0 0.0
    %398 = vmatpush1.msra.mxu0 0.0
    %399 = vmatprep.subr.mxu0 0.0
    %400 = vmatpush1.msra.mxu0 0.0
    %401 = vmatprep.subr.mxu0 0.0
    %402 = vmatpush1.msra.mxu0 %v368
    %403 = vmatprep.subr.mxu0 0.0
    %404 = vmatpush1.msra.mxu0 %v367
    %405 = vmatprep.subr.mxu0 0.0
    %406 = vmatpush1.msra.mxu0 %v366
    %407 = vmatprep.subr.mxu0 0.0
    %408 = vmatpush1.msra.mxu0 %v365
    %409 = vmatprep.subr.mxu0 0.0
    %410 = vmatpush2.msra.mxu0 0.0
    %411 = vmatprep.subr.mxu0 0.0
    %412 = vmatpush2.msra.mxu0 0.0
    %413 = vmatprep.subr.mxu0 0.0
    %414 = vmatpush2.msra.mxu0 0.0
    %415 = vmatprep.subr.mxu0 0.0
    %416 = vmatpush2.msra.mxu0 0.0
    %417 = vmatprep.subr.mxu0 0.0
    %418 = vmatpush2.msra.mxu0 0.0
    %419 = vmatprep.subr.mxu0 0.0
    %420 = vmatpush2.msra.mxu0 0.0
    %421 = vmatprep.subr.mxu0 0.0
    %422 = vmatpush2.msra.mxu0 0.0
    %423 = vmatprep.subr.mxu0 0.0
    %424 = vmatpush2.msra.mxu0 0.0
    %425 = vmatprep.subr.mxu0 0.0
    %426 = vmatpush2.msra.mxu0 0.0
    %427 = vmatprep.subr.mxu0 0.0
    %428 = vmatpush2.msra.mxu0 0.0
    %429 = vmatprep.subr.mxu0 0.0
    %430 = vmatpush2.msra.mxu0 0.0
    %431 = vmatprep.subr.mxu0 0.0
    %432 = vmatpush2.msra.mxu0 0.0
    %433 = vmatprep.subr.mxu0 0.0
    %434 = vmatpush2.msra.mxu0 0.0
    %435 = vmatprep.subr.mxu0 0.0
    %436 = vmatpush2.msra.mxu0 0.0
    %437 = vmatprep.subr.mxu0 0.0
    %438 = vmatpush2.msra.mxu0 0.0
    %439 = vmatprep.subr.mxu0 0.0
    %440 = vmatpush2.msra.mxu0 0.0
    %441 = vmatprep.mubr.f32.mxu0 0.0
    %442 = vmatmul.mubr.f32.gmra.mxu0 %v209
    %v443 = vpop.f32.mrf.mxu0
    %v444 = vadd.f32 %v375, %v443
    %v445 = vpop.f32.mrf.mxu0
    %446 = vdwg.mxu0
    %s447 = scalar_lea.vmem %s5, 96
    %v448 = vld [vmem:[%s447] sm:$0xff]
    %v449 = vld [vmem:[%s447 + $0x8] sm:$0xff]
    %v450 = vld [vmem:[%s447 + $0x10] sm:$0xff]
    %v451 = vld [vmem:[%s447 + $0x18] sm:$0xff]
    %s452 = scalar_lea.vmem %s6, 3
    %v453 = vld [vmem:[%s452] sm:$0x1]
    %v455 = vlaneseq
    %v456 = vshrl.u32 %v455, 7
    %v457 = vsub.s32 0, %v456
    %v458 = vrot.slane %v453, %v457
    %460 = vmatprep.subr.mxu0 0.0
    %461 = vmatpush1.msra.mxu0 0.0
    %462 = vmatprep.subr.mxu0 0.0
    %463 = vmatpush1.msra.mxu0 0.0
    %464 = vmatprep.subr.mxu0 0.0
    %465 = vmatpush1.msra.mxu0 0.0
    %466 = vmatprep.subr.mxu0 0.0
    %467 = vmatpush1.msra.mxu0 0.0
    %468 = vmatprep.subr.mxu0 0.0
    %469 = vmatpush1.msra.mxu0 0.0
    %470 = vmatprep.subr.mxu0 0.0
    %471 = vmatpush1.msra.mxu0 0.0
    %472 = vmatprep.subr.mxu0 0.0
    %473 = vmatpush1.msra.mxu0 0.0
    %474 = vmatprep.subr.mxu0 0.0
    %475 = vmatpush1.msra.mxu0 0.0
    %476 = vmatprep.subr.mxu0 0.0
    %477 = vmatpush1.msra.mxu0 0.0
    %478 = vmatprep.subr.mxu0 0.0
    %479 = vmatpush1.msra.mxu0 0.0
    %480 = vmatprep.subr.mxu0 0.0
    %481 = vmatpush1.msra.mxu0 0.0
    %482 = vmatprep.subr.mxu0 0.0
    %483 = vmatpush1.msra.mxu0 0.0
    %484 = vmatprep.subr.mxu0 0.0
    %485 = vmatpush1.msra.mxu0 %v451
    %486 = vmatprep.subr.mxu0 0.0
    %487 = vmatpush1.msra.mxu0 %v450
    %488 = vmatprep.subr.mxu0 0.0
    %489 = vmatpush1.msra.mxu0 %v449
    %490 = vmatprep.subr.mxu0 0.0
    %491 = vmatpush1.msra.mxu0 %v448
    %492 = vmatprep.subr.mxu0 0.0
    %493 = vmatpush2.msra.mxu0 0.0
    %494 = vmatprep.subr.mxu0 0.0
    %495 = vmatpush2.msra.mxu0 0.0
    %496 = vmatprep.subr.mxu0 0.0
    %497 = vmatpush2.msra.mxu0 0.0
    %498 = vmatprep.subr.mxu0 0.0
    %499 = vmatpush2.msra.mxu0 0.0
    %500 = vmatprep.subr.mxu0 0.0
    %501 = vmatpush2.msra.mxu0 0.0
    %502 = vmatprep.subr.mxu0 0.0
    %503 = vmatpush2.msra.mxu0 0.0
    %504 = vmatprep.subr.mxu0 0.0
    %505 = vmatpush2.msra.mxu0 0.0
    %506 = vmatprep.subr.mxu0 0.0
    %507 = vmatpush2.msra.mxu0 0.0
    %508 = vmatprep.subr.mxu0 0.0
    %509 = vmatpush2.msra.mxu0 0.0
    %510 = vmatprep.subr.mxu0 0.0
    %511 = vmatpush2.msra.mxu0 0.0
    %512 = vmatprep.subr.mxu0 0.0
    %513 = vmatpush2.msra.mxu0 0.0
    %514 = vmatprep.subr.mxu0 0.0
    %515 = vmatpush2.msra.mxu0 0.0
    %516 = vmatprep.subr.mxu0 0.0
    %517 = vmatpush2.msra.mxu0 0.0
    %518 = vmatprep.subr.mxu0 0.0
    %519 = vmatpush2.msra.mxu0 0.0
    %520 = vmatprep.subr.mxu0 0.0
    %521 = vmatpush2.msra.mxu0 0.0
    %522 = vmatprep.subr.mxu0 0.0
    %523 = vmatpush2.msra.mxu0 0.0
    %524 = vmatprep.mubr.f32.mxu0 0.0
    %525 = vmatmul.mubr.f32.gmra.mxu0 %v209
    %v526 = vpop.f32.mrf.mxu0
    %v527 = vadd.f32 %v458, %v526
    %v528 = vpop.f32.mrf.mxu0
    %529 = vdwg.mxu0
    %v530 = vmul.f32 %v444, 1.442695
    %v531 = vpow.pop %v530
    %v532 = vadd.f32 %v531, 1e-08
    %v533 = vrcp.pop %v532
    %v534 = vmul.f32 1.0, %v533
    %v535 = vmul.f32 %v527, 1.442695
    %v536 = vpow.pop %v535
    %v537 = vadd.f32 %v536, 1e-08
    %v538 = vrcp.pop %v537
    %v539 = vmul.f32 1.0, %v538
    %v540 = vmul.f32 %v278, %v534
    %v541 = vmul.f32 %v361, %v539
    %v542 = vld [vmem:[%s15] sm:$0x3]
    %v543 = vld [vmem:[%s13] sm:$0x3]
    %s544 = scalar_lea.vmem %s13, 2
    %v545 = vld [vmem:[%s544] sm:$0x3]
    %vm546 = vcmask 15360
    %v548 = vsel %vm546, %v545, 0
    %vm550 = vcmask 1041408
    %v552 = vsel %vm550, %v539, 0
    %554 = vmatprep.subr.mxu0 0.0
    %555 = vmatpush1.msra.mxu0 0.0
    %556 = vmatprep.subr.mxu0 0.0
    %557 = vmatpush1.msra.mxu0 0.0
    %558 = vmatprep.subr.mxu0 0.0
    %559 = vmatpush1.msra.mxu0 0.0
    %560 = vmatprep.subr.mxu0 0.0
    %561 = vmatpush1.msra.mxu0 0.0
    %562 = vmatprep.subr.mxu0 0.0
    %563 = vmatpush1.msra.mxu0 0.0
    %564 = vmatprep.subr.mxu0 0.0
    %565 = vmatpush1.msra.mxu0 0.0
    %566 = vmatprep.subr.mxu0 0.0
    %567 = vmatpush1.msra.mxu0 0.0
    %568 = vmatprep.subr.mxu0 0.0
    %569 = vmatpush1.msra.mxu0 0.0
    %570 = vmatprep.subr.mxu0 0.0
    %571 = vmatpush1.msra.mxu0 0.0
    %572 = vmatprep.subr.mxu0 0.0
    %573 = vmatpush1.msra.mxu0 0.0
    %574 = vmatprep.subr.mxu0 0.0
    %575 = vmatpush1.msra.mxu0 0.0
    %576 = vmatprep.subr.mxu0 0.0
    %577 = vmatpush1.msra.mxu0 0.0
    %578 = vmatprep.subr.mxu0 0.0
    %579 = vmatpush1.msra.mxu0 0.0
    %580 = vmatprep.subr.mxu0 0.0
    %581 = vmatpush1.msra.mxu0 0.0
    %582 = vmatprep.subr.mxu0 0.0
    %583 = vmatpush1.msra.mxu0 0.0
    %584 = vmatprep.subr.mxu0 0.0
    %585 = vmatpush1.msra.mxu0 %v552
    %586 = vmatprep.subr.mxu0 0.0
    %587 = vmatpush2.msra.mxu0 0.0
    %588 = vmatprep.subr.mxu0 0.0
    %589 = vmatpush2.msra.mxu0 0.0
    %590 = vmatprep.subr.mxu0 0.0
    %591 = vmatpush2.msra.mxu0 0.0
    %592 = vmatprep.subr.mxu0 0.0
    %593 = vmatpush2.msra.mxu0 0.0
    %594 = vmatprep.subr.mxu0 0.0
    %595 = vmatpush2.msra.mxu0 0.0
    %596 = vmatprep.subr.mxu0 0.0
    %597 = vmatpush2.msra.mxu0 0.0
    %598 = vmatprep.subr.mxu0 0.0
    %599 = vmatpush2.msra.mxu0 0.0
    %600 = vmatprep.subr.mxu0 0.0
    %601 = vmatpush2.msra.mxu0 0.0
    %602 = vmatprep.subr.mxu0 0.0
    %603 = vmatpush2.msra.mxu0 0.0
    %604 = vmatprep.subr.mxu0 0.0
    %605 = vmatpush2.msra.mxu0 0.0
    %606 = vmatprep.subr.mxu0 0.0
    %607 = vmatpush2.msra.mxu0 0.0
    %608 = vmatprep.subr.mxu0 0.0
    %609 = vmatpush2.msra.mxu0 0.0
    %610 = vmatprep.subr.mxu0 0.0
    %611 = vmatpush2.msra.mxu0 0.0
    %612 = vmatprep.subr.mxu0 0.0
    %613 = vmatpush2.msra.mxu0 0.0
    %614 = vmatprep.subr.mxu0 0.0
    %615 = vmatpush2.msra.mxu0 0.0
    %616 = vmatprep.subr.mxu0 0.0
    %617 = vmatpush2.msra.mxu0 0.0
    %618 = vmatprep.mubr.f32.mxu0 0.0
    %619 = vmatmul.mubr.f32.gmra.mxu0 %v548
    %v620 = vpop.f32.mrf.mxu0
    %v621 = vadd.f32 0.0, %v620
    %v622 = vpop.f32.mrf.mxu0
    %623 = vdwg.mxu0
    %v625 = vsel %vm546, %v543, 0
    %v628 = vsel %vm550, %v534, 0
    %630 = vmatprep.subr.mxu0 0.0
    %631 = vmatpush1.msra.mxu0 0.0
    %632 = vmatprep.subr.mxu0 0.0
    %633 = vmatpush1.msra.mxu0 0.0
    %634 = vmatprep.subr.mxu0 0.0
    %635 = vmatpush1.msra.mxu0 0.0
    %636 = vmatprep.subr.mxu0 0.0
    %637 = vmatpush1.msra.mxu0 0.0
    %638 = vmatprep.subr.mxu0 0.0
    %639 = vmatpush1.msra.mxu0 0.0
    %640 = vmatprep.subr.mxu0 0.0
    %641 = vmatpush1.msra.mxu0 0.0
    %642 = vmatprep.subr.mxu0 0.0
    %643 = vmatpush1.msra.mxu0 0.0
    %644 = vmatprep.subr.mxu0 0.0
    %645 = vmatpush1.msra.mxu0 0.0
    %646 = vmatprep.subr.mxu0 0.0
    %647 = vmatpush1.msra.mxu0 0.0
    %648 = vmatprep.subr.mxu0 0.0
    %649 = vmatpush1.msra.mxu0 0.0
    %650 = vmatprep.subr.mxu0 0.0
    %651 = vmatpush1.msra.mxu0 0.0
    %652 = vmatprep.subr.mxu0 0.0
    %653 = vmatpush1.msra.mxu0 0.0
    %654 = vmatprep.subr.mxu0 0.0
    %655 = vmatpush1.msra.mxu0 0.0
    %656 = vmatprep.subr.mxu0 0.0
    %657 = vmatpush1.msra.mxu0 0.0
    %658 = vmatprep.subr.mxu0 0.0
    %659 = vmatpush1.msra.mxu0 0.0
    %660 = vmatprep.subr.mxu0 0.0
    %661 = vmatpush1.msra.mxu0 %v628
    %662 = vmatprep.subr.mxu0 0.0
    %663 = vmatpush2.msra.mxu0 0.0
    %664 = vmatprep.subr.mxu0 0.0
    %665 = vmatpush2.msra.mxu0 0.0
    %666 = vmatprep.subr.mxu0 0.0
    %667 = vmatpush2.msra.mxu0 0.0
    %668 = vmatprep.subr.mxu0 0.0
    %669 = vmatpush2.msra.mxu0 0.0
    %670 = vmatprep.subr.mxu0 0.0
    %671 = vmatpush2.msra.mxu0 0.0
    %672 = vmatprep.subr.mxu0 0.0
    %673 = vmatpush2.msra.mxu0 0.0
    %674 = vmatprep.subr.mxu0 0.0
    %675 = vmatpush2.msra.mxu0 0.0
    %676 = vmatprep.subr.mxu0 0.0
    %677 = vmatpush2.msra.mxu0 0.0
    %678 = vmatprep.subr.mxu0 0.0
    %679 = vmatpush2.msra.mxu0 0.0
    %680 = vmatprep.subr.mxu0 0.0
    %681 = vmatpush2.msra.mxu0 0.0
    %682 = vmatprep.subr.mxu0 0.0
    %683 = vmatpush2.msra.mxu0 0.0
    %684 = vmatprep.subr.mxu0 0.0
    %685 = vmatpush2.msra.mxu0 0.0
    %686 = vmatprep.subr.mxu0 0.0
    %687 = vmatpush2.msra.mxu0 0.0
    %688 = vmatprep.subr.mxu0 0.0
    %689 = vmatpush2.msra.mxu0 0.0
    %690 = vmatprep.subr.mxu0 0.0
    %691 = vmatpush2.msra.mxu0 0.0
    %692 = vmatprep.subr.mxu0 0.0
    %693 = vmatpush2.msra.mxu0 0.0
    %694 = vmatprep.mubr.f32.mxu0 0.0
    %695 = vmatmul.mubr.f32.gmra.mxu0 %v625
    %v696 = vpop.f32.mrf.mxu0
    %v697 = vadd.f32 %v621, %v696
    %v698 = vpop.f32.mrf.mxu0
    %699 = vdwg.mxu0
    %v700 = vld [vmem:[%s14] sm:$0x3]
    %702 = vset.pattern.permute.xlu0 0
    %703 = vperm.xlu0 %702, %v700
    %v704 = vpop.permute.xlu0 %703
    %v706 = vadd.f32 %v697, %v704
    %v708 = vsel %vm550, %v541, 0
    %710 = vmatprep.subr.mxu0 0.0
    %711 = vmatpush1.msra.mxu0 0.0
    %712 = vmatprep.subr.mxu0 0.0
    %713 = vmatpush1.msra.mxu0 0.0
    %714 = vmatprep.subr.mxu0 0.0
    %715 = vmatpush1.msra.mxu0 0.0
    %716 = vmatprep.subr.mxu0 0.0
    %717 = vmatpush1.msra.mxu0 0.0
    %718 = vmatprep.subr.mxu0 0.0
    %719 = vmatpush1.msra.mxu0 0.0
    %720 = vmatprep.subr.mxu0 0.0
    %721 = vmatpush1.msra.mxu0 0.0
    %722 = vmatprep.subr.mxu0 0.0
    %723 = vmatpush1.msra.mxu0 0.0
    %724 = vmatprep.subr.mxu0 0.0
    %725 = vmatpush1.msra.mxu0 0.0
    %726 = vmatprep.subr.mxu0 0.0
    %727 = vmatpush1.msra.mxu0 0.0
    %728 = vmatprep.subr.mxu0 0.0
    %729 = vmatpush1.msra.mxu0 0.0
    %730 = vmatprep.subr.mxu0 0.0
    %731 = vmatpush1.msra.mxu0 0.0
    %732 = vmatprep.subr.mxu0 0.0
    %733 = vmatpush1.msra.mxu0 0.0
    %734 = vmatprep.subr.mxu0 0.0
    %735 = vmatpush1.msra.mxu0 0.0
    %736 = vmatprep.subr.mxu0 0.0
    %737 = vmatpush1.msra.mxu0 0.0
    %738 = vmatprep.subr.mxu0 0.0
    %739 = vmatpush1.msra.mxu0 0.0
    %740 = vmatprep.subr.mxu0 0.0
    %741 = vmatpush1.msra.mxu0 %v708
    %742 = vmatprep.subr.mxu0 0.0
    %743 = vmatpush2.msra.mxu0 0.0
    %744 = vmatprep.subr.mxu0 0.0
    %745 = vmatpush2.msra.mxu0 0.0
    %746 = vmatprep.subr.mxu0 0.0
    %747 = vmatpush2.msra.mxu0 0.0
    %748 = vmatprep.subr.mxu0 0.0
    %749 = vmatpush2.msra.mxu0 0.0
    %750 = vmatprep.subr.mxu0 0.0
    %751 = vmatpush2.msra.mxu0 0.0
    %752 = vmatprep.subr.mxu0 0.0
    %753 = vmatpush2.msra.mxu0 0.0
    %754 = vmatprep.subr.mxu0 0.0
    %755 = vmatpush2.msra.mxu0 0.0
    %756 = vmatprep.subr.mxu0 0.0
    %757 = vmatpush2.msra.mxu0 0.0
    %758 = vmatprep.subr.mxu0 0.0
    %759 = vmatpush2.msra.mxu0 0.0
    %760 = vmatprep.subr.mxu0 0.0
    %761 = vmatpush2.msra.mxu0 0.0
    %762 = vmatprep.subr.mxu0 0.0
    %763 = vmatpush2.msra.mxu0 0.0
    %764 = vmatprep.subr.mxu0 0.0
    %765 = vmatpush2.msra.mxu0 0.0
    %766 = vmatprep.subr.mxu0 0.0
    %767 = vmatpush2.msra.mxu0 0.0
    %768 = vmatprep.subr.mxu0 0.0
    %769 = vmatpush2.msra.mxu0 0.0
    %770 = vmatprep.subr.mxu0 0.0
    %771 = vmatpush2.msra.mxu0 0.0
    %772 = vmatprep.subr.mxu0 0.0
    %773 = vmatpush2.msra.mxu0 0.0
    %774 = vmatprep.mubr.f32.mxu0 0.0
    %775 = vmatmul.mubr.f32.gmra.mxu0 %v548
    %v776 = vpop.f32.mrf.mxu0
    %v777 = vadd.f32 0.0, %v776
    %v778 = vpop.f32.mrf.mxu0
    %779 = vdwg.mxu0
    %v781 = vsel %vm550, %v540, 0
    %783 = vmatprep.subr.mxu0 0.0
    %784 = vmatpush1.msra.mxu0 0.0
    %785 = vmatprep.subr.mxu0 0.0
    %786 = vmatpush1.msra.mxu0 0.0
    %787 = vmatprep.subr.mxu0 0.0
    %788 = vmatpush1.msra.mxu0 0.0
    %789 = vmatprep.subr.mxu0 0.0
    %790 = vmatpush1.msra.mxu0 0.0
    %791 = vmatprep.subr.mxu0 0.0
    %792 = vmatpush1.msra.mxu0 0.0
    %793 = vmatprep.subr.mxu0 0.0
    %794 = vmatpush1.msra.mxu0 0.0
    %795 = vmatprep.subr.mxu0 0.0
    %796 = vmatpush1.msra.mxu0 0.0
    %797 = vmatprep.subr.mxu0 0.0
    %798 = vmatpush1.msra.mxu0 0.0
    %799 = vmatprep.subr.mxu0 0.0
    %800 = vmatpush1.msra.mxu0 0.0
    %801 = vmatprep.subr.mxu0 0.0
    %802 = vmatpush1.msra.mxu0 0.0
    %803 = vmatprep.subr.mxu0 0.0
    %804 = vmatpush1.msra.mxu0 0.0
    %805 = vmatprep.subr.mxu0 0.0
    %806 = vmatpush1.msra.mxu0 0.0
    %807 = vmatprep.subr.mxu0 0.0
    %808 = vmatpush1.msra.mxu0 0.0
    %809 = vmatprep.subr.mxu0 0.0
    %810 = vmatpush1.msra.mxu0 0.0
    %811 = vmatprep.subr.mxu0 0.0
    %812 = vmatpush1.msra.mxu0 0.0
    %813 = vmatprep.subr.mxu0 0.0
    %814 = vmatpush1.msra.mxu0 %v781
    %815 = vmatprep.subr.mxu0 0.0
    %816 = vmatpush2.msra.mxu0 0.0
    %817 = vmatprep.subr.mxu0 0.0
    %818 = vmatpush2.msra.mxu0 0.0
    %819 = vmatprep.subr.mxu0 0.0
    %820 = vmatpush2.msra.mxu0 0.0
    %821 = vmatprep.subr.mxu0 0.0
    %822 = vmatpush2.msra.mxu0 0.0
    %823 = vmatprep.subr.mxu0 0.0
    %824 = vmatpush2.msra.mxu0 0.0
    %825 = vmatprep.subr.mxu0 0.0
    %826 = vmatpush2.msra.mxu0 0.0
    %827 = vmatprep.subr.mxu0 0.0
    %828 = vmatpush2.msra.mxu0 0.0
    %829 = vmatprep.subr.mxu0 0.0
    %830 = vmatpush2.msra.mxu0 0.0
    %831 = vmatprep.subr.mxu0 0.0
    %832 = vmatpush2.msra.mxu0 0.0
    %833 = vmatprep.subr.mxu0 0.0
    %834 = vmatpush2.msra.mxu0 0.0
    %835 = vmatprep.subr.mxu0 0.0
    %836 = vmatpush2.msra.mxu0 0.0
    %837 = vmatprep.subr.mxu0 0.0
    %838 = vmatpush2.msra.mxu0 0.0
    %839 = vmatprep.subr.mxu0 0.0
    %840 = vmatpush2.msra.mxu0 0.0
    %841 = vmatprep.subr.mxu0 0.0
    %842 = vmatpush2.msra.mxu0 0.0
    %843 = vmatprep.subr.mxu0 0.0
    %844 = vmatpush2.msra.mxu0 0.0
    %845 = vmatprep.subr.mxu0 0.0
    %846 = vmatpush2.msra.mxu0 0.0
    %847 = vmatprep.mubr.f32.mxu0 0.0
    %848 = vmatmul.mubr.f32.gmra.mxu0 %v625
    %v849 = vpop.f32.mrf.mxu0
    %v850 = vadd.f32 %v777, %v849
    %v851 = vpop.f32.mrf.mxu0
    %852 = vdwg.mxu0
    %v853 = vrcp.pop %v706
    %v854 = vmul.f32 1.0, %v853
    %v855 = vmul.f32 %v850, %v854
    %v856 = vlog2.pop %v854
    %v857 = vmul.f32 %v856, 0.6931472
    %v858 = vld [vmem:[%s16] sm:$0x3]
    %v859 = vrsqrt.pop %v706
    %v860 = vmul.f32 %v858, %v859
    %v861 = vadd.f32 %v860, %v855
    %v862 = vmul.f32 %v444, 0.5
    %v863 = vmul.f32 %v862, 1.442695
    %v864 = vpow.pop %v863
    %v865 = vmul.f32 %v858, %v864
    %v866 = vadd.f32 %v865, %v278
    %868 = vset.pattern.permute.xlu0 0
    %869 = vperm.xlu0 %868, %v542
    %v870 = vpop.permute.xlu0 %869
    %v872 = vmul.f32 %v870, %v861
    %v873 = vsub.f32 1.0, %v542
    %875 = vset.pattern.permute.xlu0 0
    %876 = vperm.xlu0 %875, %v873
    %v877 = vpop.permute.xlu0 %876
    %v879 = vmul.f32 %v877, %v866
    %v880 = vadd.f32 %v872, %v879
    %v881 = vld [vmem:[%s7] sm:$0x3f]
    %v882 = vld [vmem:[%s8] sm:$0x1]
    %v884 = vlaneseq
    %v885 = vshrl.u32 %v884, 7
    %v886 = vsub.s32 0, %v885
    %v887 = vrot.slane %v882, %v886
    %vm889 = vcmask 48128
    %v891 = vsel %vm889, %v880, 0
    %vm893 = vcmask 1045504
    %v895 = vsel %vm893, %v881, 0
    %897 = vmatprep.subr.mxu0 0.0
    %898 = vmatpush1.msra.mxu0 0.0
    %899 = vmatprep.subr.mxu0 0.0
    %900 = vmatpush1.msra.mxu0 0.0
    %901 = vmatprep.subr.mxu0 0.0
    %902 = vmatpush1.msra.mxu0 0.0
    %903 = vmatprep.subr.mxu0 0.0
    %904 = vmatpush1.msra.mxu0 0.0
    %905 = vmatprep.subr.mxu0 0.0
    %906 = vmatpush1.msra.mxu0 0.0
    %907 = vmatprep.subr.mxu0 0.0
    %908 = vmatpush1.msra.mxu0 0.0
    %909 = vmatprep.subr.mxu0 0.0
    %910 = vmatpush1.msra.mxu0 0.0
    %911 = vmatprep.subr.mxu0 0.0
    %912 = vmatpush1.msra.mxu0 0.0
    %913 = vmatprep.subr.mxu0 0.0
    %914 = vmatpush1.msra.mxu0 0.0
    %915 = vmatprep.subr.mxu0 0.0
    %916 = vmatpush1.msra.mxu0 0.0
    %917 = vmatprep.subr.mxu0 0.0
    %918 = vmatpush1.msra.mxu0 0.0
    %919 = vmatprep.subr.mxu0 0.0
    %920 = vmatpush1.msra.mxu0 0.0
    %921 = vmatprep.subr.mxu0 0.0
    %922 = vmatpush1.msra.mxu0 0.0
    %923 = vmatprep.subr.mxu0 0.0
    %924 = vmatpush1.msra.mxu0 0.0
    %925 = vmatprep.subr.mxu0 0.0
    %926 = vmatpush1.msra.mxu0 0.0
    %927 = vmatprep.subr.mxu0 0.0
    %928 = vmatpush1.msra.mxu0 %v895
    %929 = vmatprep.subr.mxu0 0.0
    %930 = vmatpush2.msra.mxu0 0.0
    %931 = vmatprep.subr.mxu0 0.0
    %932 = vmatpush2.msra.mxu0 0.0
    %933 = vmatprep.subr.mxu0 0.0
    %934 = vmatpush2.msra.mxu0 0.0
    %935 = vmatprep.subr.mxu0 0.0
    %936 = vmatpush2.msra.mxu0 0.0
    %937 = vmatprep.subr.mxu0 0.0
    %938 = vmatpush2.msra.mxu0 0.0
    %939 = vmatprep.subr.mxu0 0.0
    %940 = vmatpush2.msra.mxu0 0.0
    %941 = vmatprep.subr.mxu0 0.0
    %942 = vmatpush2.msra.mxu0 0.0
    %943 = vmatprep.subr.mxu0 0.0
    %944 = vmatpush2.msra.mxu0 0.0
    %945 = vmatprep.subr.mxu0 0.0
    %946 = vmatpush2.msra.mxu0 0.0
    %947 = vmatprep.subr.mxu0 0.0
    %948 = vmatpush2.msra.mxu0 0.0
    %949 = vmatprep.subr.mxu0 0.0
    %950 = vmatpush2.msra.mxu0 0.0
    %951 = vmatprep.subr.mxu0 0.0
    %952 = vmatpush2.msra.mxu0 0.0
    %953 = vmatprep.subr.mxu0 0.0
    %954 = vmatpush2.msra.mxu0 0.0
    %955 = vmatprep.subr.mxu0 0.0
    %956 = vmatpush2.msra.mxu0 0.0
    %957 = vmatprep.subr.mxu0 0.0
    %958 = vmatpush2.msra.mxu0 0.0
    %959 = vmatprep.subr.mxu0 0.0
    %960 = vmatpush2.msra.mxu0 0.0
    %961 = vmatprep.mubr.f32.mxu0 0.0
    %962 = vmatmul.mubr.f32.gmra.mxu0 %v891
    %v963 = vpop.f32.mrf.mxu0
    %v964 = vadd.f32 %v887, %v963
    %v965 = vpop.f32.mrf.mxu0
    %966 = vdwg.mxu0
    %v967 = vxor.u32 %v964, 2147483648
    %v968 = vmul.f32 %v967, 1.442695
    %v969 = vpow.pop %v968
    %v970 = vadd.f32 %v969, 1.0
    %v971 = vrcp.pop %v970
    %v972 = vmul.f32 1.0, %v971
    %v973 = vmul.f32 %v964, %v972
    %v974 = vld [vmem:[%s9] sm:$0xff]
    %v975 = vld [vmem:[%s9 + $0x8] sm:$0xff]
    %v976 = vld [vmem:[%s9 + $0x10] sm:$0xff]
    %v977 = vld [vmem:[%s9 + $0x18] sm:$0xff]
    %v978 = vld [vmem:[%s10] sm:$0x1]
    %v980 = vlaneseq
    %v981 = vshrl.u32 %v980, 7
    %v982 = vsub.s32 0, %v981
    %v983 = vrot.slane %v978, %v982
    %v986 = vsel %vm116, %v973, 0
    %988 = vmatprep.subr.mxu0 0.0
    %989 = vmatpush1.msra.mxu0 0.0
    %990 = vmatprep.subr.mxu0 0.0
    %991 = vmatpush1.msra.mxu0 0.0
    %992 = vmatprep.subr.mxu0 0.0
    %993 = vmatpush1.msra.mxu0 0.0
    %994 = vmatprep.subr.mxu0 0.0
    %995 = vmatpush1.msra.mxu0 0.0
    %996 = vmatprep.subr.mxu0 0.0
    %997 = vmatpush1.msra.mxu0 0.0
    %998 = vmatprep.subr.mxu0 0.0
    %999 = vmatpush1.msra.mxu0 0.0
    %1000 = vmatprep.subr.mxu0 0.0
    %1001 = vmatpush1.msra.mxu0 0.0
    %1002 = vmatprep.subr.mxu0 0.0
    %1003 = vmatpush1.msra.mxu0 0.0
    %1004 = vmatprep.subr.mxu0 0.0
    %1005 = vmatpush1.msra.mxu0 0.0
    %1006 = vmatprep.subr.mxu0 0.0
    %1007 = vmatpush1.msra.mxu0 0.0
    %1008 = vmatprep.subr.mxu0 0.0
    %1009 = vmatpush1.msra.mxu0 0.0
    %1010 = vmatprep.subr.mxu0 0.0
    %1011 = vmatpush1.msra.mxu0 0.0
    %1012 = vmatprep.subr.mxu0 0.0
    %1013 = vmatpush1.msra.mxu0 %v977
    %1014 = vmatprep.subr.mxu0 0.0
    %1015 = vmatpush1.msra.mxu0 %v976
    %1016 = vmatprep.subr.mxu0 0.0
    %1017 = vmatpush1.msra.mxu0 %v975
    %1018 = vmatprep.subr.mxu0 0.0
    %1019 = vmatpush1.msra.mxu0 %v974
    %1020 = vmatprep.subr.mxu0 0.0
    %1021 = vmatpush2.msra.mxu0 0.0
    %1022 = vmatprep.subr.mxu0 0.0
    %1023 = vmatpush2.msra.mxu0 0.0
    %1024 = vmatprep.subr.mxu0 0.0
    %1025 = vmatpush2.msra.mxu0 0.0
    %1026 = vmatprep.subr.mxu0 0.0
    %1027 = vmatpush2.msra.mxu0 0.0
    %1028 = vmatprep.subr.mxu0 0.0
    %1029 = vmatpush2.msra.mxu0 0.0
    %1030 = vmatprep.subr.mxu0 0.0
    %1031 = vmatpush2.msra.mxu0 0.0
    %1032 = vmatprep.subr.mxu0 0.0
    %1033 = vmatpush2.msra.mxu0 0.0
    %1034 = vmatprep.subr.mxu0 0.0
    %1035 = vmatpush2.msra.mxu0 0.0
    %1036 = vmatprep.subr.mxu0 0.0
    %1037 = vmatpush2.msra.mxu0 0.0
    %1038 = vmatprep.subr.mxu0 0.0
    %1039 = vmatpush2.msra.mxu0 0.0
    %1040 = vmatprep.subr.mxu0 0.0
    %1041 = vmatpush2.msra.mxu0 0.0
    %1042 = vmatprep.subr.mxu0 0.0
    %1043 = vmatpush2.msra.mxu0 0.0
    %1044 = vmatprep.subr.mxu0 0.0
    %1045 = vmatpush2.msra.mxu0 0.0
    %1046 = vmatprep.subr.mxu0 0.0
    %1047 = vmatpush2.msra.mxu0 0.0
    %1048 = vmatprep.subr.mxu0 0.0
    %1049 = vmatpush2.msra.mxu0 0.0
    %1050 = vmatprep.subr.mxu0 0.0
    %1051 = vmatpush2.msra.mxu0 0.0
    %1052 = vmatprep.mubr.f32.mxu0 0.0
    %1053 = vmatmul.mubr.f32.gmra.mxu0 %v986
    %v1054 = vpop.f32.mrf.mxu0
    %v1055 = vadd.f32 %v983, %v1054
    %v1056 = vpop.f32.mrf.mxu0
    %1057 = vdwg.mxu0
    %v1058 = vxor.u32 %v1055, 2147483648
    %v1059 = vmul.f32 %v1058, 1.442695
    %v1060 = vpow.pop %v1059
    %v1061 = vadd.f32 %v1060, 1.0
    %v1062 = vrcp.pop %v1061
    %v1063 = vmul.f32 1.0, %v1062
    %v1064 = vmul.f32 %v1055, %v1063
    %v1065 = vld [vmem:[%s11] sm:$0xff]
    %v1066 = vld [vmem:[%s11 + $0x8] sm:$0xff]
    %v1067 = vld [vmem:[%s11 + $0x10] sm:$0xff]
    %v1068 = vld [vmem:[%s11 + $0x18] sm:$0xff]
    %v1069 = vld [vmem:[%s12] sm:$0x1]
    %v1071 = vlaneseq
    %v1072 = vshrl.u32 %v1071, 7
    %v1073 = vsub.s32 0, %v1072
    %v1074 = vrot.slane %v1069, %v1073
    %v1077 = vsel %vm116, %v1064, 0
    %1079 = vmatprep.subr.mxu0 0.0
    %1080 = vmatpush1.msra.mxu0 0.0
    %1081 = vmatprep.subr.mxu0 0.0
    %1082 = vmatpush1.msra.mxu0 0.0
    %1083 = vmatprep.subr.mxu0 0.0
    %1084 = vmatpush1.msra.mxu0 0.0
    %1085 = vmatprep.subr.mxu0 0.0
    %1086 = vmatpush1.msra.mxu0 0.0
    %1087 = vmatprep.subr.mxu0 0.0
    %1088 = vmatpush1.msra.mxu0 0.0
    %1089 = vmatprep.subr.mxu0 0.0
    %1090 = vmatpush1.msra.mxu0 0.0
    %1091 = vmatprep.subr.mxu0 0.0
    %1092 = vmatpush1.msra.mxu0 0.0
    %1093 = vmatprep.subr.mxu0 0.0
    %1094 = vmatpush1.msra.mxu0 0.0
    %1095 = vmatprep.subr.mxu0 0.0
    %1096 = vmatpush1.msra.mxu0 0.0
    %1097 = vmatprep.subr.mxu0 0.0
    %1098 = vmatpush1.msra.mxu0 0.0
    %1099 = vmatprep.subr.mxu0 0.0
    %1100 = vmatpush1.msra.mxu0 0.0
    %1101 = vmatprep.subr.mxu0 0.0
    %1102 = vmatpush1.msra.mxu0 0.0
    %1103 = vmatprep.subr.mxu0 0.0
    %1104 = vmatpush1.msra.mxu0 %v1068
    %1105 = vmatprep.subr.mxu0 0.0
    %1106 = vmatpush1.msra.mxu0 %v1067
    %1107 = vmatprep.subr.mxu0 0.0
    %1108 = vmatpush1.msra.mxu0 %v1066
    %1109 = vmatprep.subr.mxu0 0.0
    %1110 = vmatpush1.msra.mxu0 %v1065
    %1111 = vmatprep.subr.mxu0 0.0
    %1112 = vmatpush2.msra.mxu0 0.0
    %1113 = vmatprep.subr.mxu0 0.0
    %1114 = vmatpush2.msra.mxu0 0.0
    %1115 = vmatprep.subr.mxu0 0.0
    %1116 = vmatpush2.msra.mxu0 0.0
    %1117 = vmatprep.subr.mxu0 0.0
    %1118 = vmatpush2.msra.mxu0 0.0
    %1119 = vmatprep.subr.mxu0 0.0
    %1120 = vmatpush2.msra.mxu0 0.0
    %1121 = vmatprep.subr.mxu0 0.0
    %1122 = vmatpush2.msra.mxu0 0.0
    %1123 = vmatprep.subr.mxu0 0.0
    %1124 = vmatpush2.msra.mxu0 0.0
    %1125 = vmatprep.subr.mxu0 0.0
    %1126 = vmatpush2.msra.mxu0 0.0
    %1127 = vmatprep.subr.mxu0 0.0
    %1128 = vmatpush2.msra.mxu0 0.0
    %1129 = vmatprep.subr.mxu0 0.0
    %1130 = vmatpush2.msra.mxu0 0.0
    %1131 = vmatprep.subr.mxu0 0.0
    %1132 = vmatpush2.msra.mxu0 0.0
    %1133 = vmatprep.subr.mxu0 0.0
    %1134 = vmatpush2.msra.mxu0 0.0
    %1135 = vmatprep.subr.mxu0 0.0
    %1136 = vmatpush2.msra.mxu0 0.0
    %1137 = vmatprep.subr.mxu0 0.0
    %1138 = vmatpush2.msra.mxu0 0.0
    %1139 = vmatprep.subr.mxu0 0.0
    %1140 = vmatpush2.msra.mxu0 0.0
    %1141 = vmatprep.subr.mxu0 0.0
    %1142 = vmatpush2.msra.mxu0 0.0
    %1143 = vmatprep.mubr.f32.mxu0 0.0
    %1144 = vmatmul.mubr.f32.gmra.mxu0 %v1077
    %v1145 = vpop.f32.mrf.mxu0
    %v1146 = vadd.f32 %v1074, %v1145
    %v1147 = vpop.f32.mrf.mxu0
    %1148 = vdwg.mxu0
    %vm1149 = vcmask 41984
    %1150 = vst.msk [vmem:[%s17] sm:$0x3] %vm1149, %v278
    %s1151 = scalar_lea.vmem %s17, 4
    %1152 = vst.msk [vmem:[%s1151] sm:$0x3] %vm1149, %v444
    %s1153 = scalar_lea.vmem %s17, 8
    %1154 = vst.msk [vmem:[%s1153] sm:$0x3] %vm1149, %v855
    %s1155 = scalar_lea.vmem %s17, 12
    %1156 = vst.msk [vmem:[%s1155] sm:$0x3] %vm1149, %v857
    %vm1157 = vcmask 58368
    %1158 = vst.msk [vmem:[#allocation2] sm:$0x3] %vm1157, %v1146
    %s1159 = scalar_lea.vmem %s13, 4
    %v1160 = vld [vmem:[%s1159] sm:$0x3]
    %s1161 = scalar_lea.vmem %s13, 6
    %v1162 = vld [vmem:[%s1161] sm:$0x3]
    %v1164 = vsel %vm546, %v1162, 0
    %1166 = vmatprep.subr.mxu0 0.0
    %1167 = vmatpush1.msra.mxu0 0.0
    %1168 = vmatprep.subr.mxu0 0.0
    %1169 = vmatpush1.msra.mxu0 0.0
    %1170 = vmatprep.subr.mxu0 0.0
    %1171 = vmatpush1.msra.mxu0 0.0
    %1172 = vmatprep.subr.mxu0 0.0
    %1173 = vmatpush1.msra.mxu0 0.0
    %1174 = vmatprep.subr.mxu0 0.0
    %1175 = vmatpush1.msra.mxu0 0.0
    %1176 = vmatprep.subr.mxu0 0.0
    %1177 = vmatpush1.msra.mxu0 0.0
    %1178 = vmatprep.subr.mxu0 0.0
    %1179 = vmatpush1.msra.mxu0 0.0
    %1180 = vmatprep.subr.mxu0 0.0
    %1181 = vmatpush1.msra.mxu0 0.0
    %1182 = vmatprep.subr.mxu0 0.0
    %1183 = vmatpush1.msra.mxu0 0.0
    %1184 = vmatprep.subr.mxu0 0.0
    %1185 = vmatpush1.msra.mxu0 0.0
    %1186 = vmatprep.subr.mxu0 0.0
    %1187 = vmatpush1.msra.mxu0 0.0
    %1188 = vmatprep.subr.mxu0 0.0
    %1189 = vmatpush1.msra.mxu0 0.0
    %1190 = vmatprep.subr.mxu0 0.0
    %1191 = vmatpush1.msra.mxu0 0.0
    %1192 = vmatprep.subr.mxu0 0.0
    %1193 = vmatpush1.msra.mxu0 0.0
    %1194 = vmatprep.subr.mxu0 0.0
    %1195 = vmatpush1.msra.mxu0 0.0
    %1196 = vmatprep.subr.mxu0 0.0
    %1197 = vmatpush1.msra.mxu0 %v552
    %1198 = vmatprep.subr.mxu0 0.0
    %1199 = vmatpush2.msra.mxu0 0.0
    %1200 = vmatprep.subr.mxu0 0.0
    %1201 = vmatpush2.msra.mxu0 0.0
    %1202 = vmatprep.subr.mxu0 0.0
    %1203 = vmatpush2.msra.mxu0 0.0
    %1204 = vmatprep.subr.mxu0 0.0
    %1205 = vmatpush2.msra.mxu0 0.0
    %1206 = vmatprep.subr.mxu0 0.0
    %1207 = vmatpush2.msra.mxu0 0.0
    %1208 = vmatprep.subr.mxu0 0.0
    %1209 = vmatpush2.msra.mxu0 0.0
    %1210 = vmatprep.subr.mxu0 0.0
    %1211 = vmatpush2.msra.mxu0 0.0
    %1212 = vmatprep.subr.mxu0 0.0
    %1213 = vmatpush2.msra.mxu0 0.0
    %1214 = vmatprep.subr.mxu0 0.0
    %1215 = vmatpush2.msra.mxu0 0.0
    %1216 = vmatprep.subr.mxu0 0.0
    %1217 = vmatpush2.msra.mxu0 0.0
    %1218 = vmatprep.subr.mxu0 0.0
    %1219 = vmatpush2.msra.mxu0 0.0
    %1220 = vmatprep.subr.mxu0 0.0
    %1221 = vmatpush2.msra.mxu0 0.0
    %1222 = vmatprep.subr.mxu0 0.0
    %1223 = vmatpush2.msra.mxu0 0.0
    %1224 = vmatprep.subr.mxu0 0.0
    %1225 = vmatpush2.msra.mxu0 0.0
    %1226 = vmatprep.subr.mxu0 0.0
    %1227 = vmatpush2.msra.mxu0 0.0
    %1228 = vmatprep.subr.mxu0 0.0
    %1229 = vmatpush2.msra.mxu0 0.0
    %1230 = vmatprep.mubr.f32.mxu0 0.0
    %1231 = vmatmul.mubr.f32.gmra.mxu0 %v1164
    %v1232 = vpop.f32.mrf.mxu0
    %v1233 = vadd.f32 0.0, %v1232
    %v1234 = vpop.f32.mrf.mxu0
    %1235 = vdwg.mxu0
    %v1237 = vsel %vm546, %v1160, 0
    %1239 = vmatprep.subr.mxu0 0.0
    %1240 = vmatpush1.msra.mxu0 0.0
    %1241 = vmatprep.subr.mxu0 0.0
    %1242 = vmatpush1.msra.mxu0 0.0
    %1243 = vmatprep.subr.mxu0 0.0
    %1244 = vmatpush1.msra.mxu0 0.0
    %1245 = vmatprep.subr.mxu0 0.0
    %1246 = vmatpush1.msra.mxu0 0.0
    %1247 = vmatprep.subr.mxu0 0.0
    %1248 = vmatpush1.msra.mxu0 0.0
    %1249 = vmatprep.subr.mxu0 0.0
    %1250 = vmatpush1.msra.mxu0 0.0
    %1251 = vmatprep.subr.mxu0 0.0
    %1252 = vmatpush1.msra.mxu0 0.0
    %1253 = vmatprep.subr.mxu0 0.0
    %1254 = vmatpush1.msra.mxu0 0.0
    %1255 = vmatprep.subr.mxu0 0.0
    %1256 = vmatpush1.msra.mxu0 0.0
    %1257 = vmatprep.subr.mxu0 0.0
    %1258 = vmatpush1.msra.mxu0 0.0
    %1259 = vmatprep.subr.mxu0 0.0
    %1260 = vmatpush1.msra.mxu0 0.0
    %1261 = vmatprep.subr.mxu0 0.0
    %1262 = vmatpush1.msra.mxu0 0.0
    %1263 = vmatprep.subr.mxu0 0.0
    %1264 = vmatpush1.msra.mxu0 0.0
    %1265 = vmatprep.subr.mxu0 0.0
    %1266 = vmatpush1.msra.mxu0 0.0
    %1267 = vmatprep.subr.mxu0 0.0
    %1268 = vmatpush1.msra.mxu0 0.0
    %1269 = vmatprep.subr.mxu0 0.0
    %1270 = vmatpush1.msra.mxu0 %v628
    %1271 = vmatprep.subr.mxu0 0.0
    %1272 = vmatpush2.msra.mxu0 0.0
    %1273 = vmatprep.subr.mxu0 0.0
    %1274 = vmatpush2.msra.mxu0 0.0
    %1275 = vmatprep.subr.mxu0 0.0
    %1276 = vmatpush2.msra.mxu0 0.0
    %1277 = vmatprep.subr.mxu0 0.0
    %1278 = vmatpush2.msra.mxu0 0.0
    %1279 = vmatprep.subr.mxu0 0.0
    %1280 = vmatpush2.msra.mxu0 0.0
    %1281 = vmatprep.subr.mxu0 0.0
    %1282 = vmatpush2.msra.mxu0 0.0
    %1283 = vmatprep.subr.mxu0 0.0
    %1284 = vmatpush2.msra.mxu0 0.0
    %1285 = vmatprep.subr.mxu0 0.0
    %1286 = vmatpush2.msra.mxu0 0.0
    %1287 = vmatprep.subr.mxu0 0.0
    %1288 = vmatpush2.msra.mxu0 0.0
    %1289 = vmatprep.subr.mxu0 0.0
    %1290 = vmatpush2.msra.mxu0 0.0
    %1291 = vmatprep.subr.mxu0 0.0
    %1292 = vmatpush2.msra.mxu0 0.0
    %1293 = vmatprep.subr.mxu0 0.0
    %1294 = vmatpush2.msra.mxu0 0.0
    %1295 = vmatprep.subr.mxu0 0.0
    %1296 = vmatpush2.msra.mxu0 0.0
    %1297 = vmatprep.subr.mxu0 0.0
    %1298 = vmatpush2.msra.mxu0 0.0
    %1299 = vmatprep.subr.mxu0 0.0
    %1300 = vmatpush2.msra.mxu0 0.0
    %1301 = vmatprep.subr.mxu0 0.0
    %1302 = vmatpush2.msra.mxu0 0.0
    %1303 = vmatprep.mubr.f32.mxu0 0.0
    %1304 = vmatmul.mubr.f32.gmra.mxu0 %v1237
    %v1305 = vpop.f32.mrf.mxu0
    %v1306 = vadd.f32 %v1233, %v1305
    %v1307 = vpop.f32.mrf.mxu0
    %1308 = vdwg.mxu0
    %s1309 = scalar_lea.vmem %s14, 2
    %v1310 = vld [vmem:[%s1309] sm:$0x3]
    %1312 = vset.pattern.permute.xlu0 0
    %1313 = vperm.xlu0 %1312, %v1310
    %v1314 = vpop.permute.xlu0 %1313
    %v1316 = vadd.f32 %v1306, %v1314
    %1317 = vmatprep.subr.mxu0 0.0
    %1318 = vmatpush1.msra.mxu0 0.0
    %1319 = vmatprep.subr.mxu0 0.0
    %1320 = vmatpush1.msra.mxu0 0.0
    %1321 = vmatprep.subr.mxu0 0.0
    %1322 = vmatpush1.msra.mxu0 0.0
    %1323 = vmatprep.subr.mxu0 0.0
    %1324 = vmatpush1.msra.mxu0 0.0
    %1325 = vmatprep.subr.mxu0 0.0
    %1326 = vmatpush1.msra.mxu0 0.0
    %1327 = vmatprep.subr.mxu0 0.0
    %1328 = vmatpush1.msra.mxu0 0.0
    %1329 = vmatprep.subr.mxu0 0.0
    %1330 = vmatpush1.msra.mxu0 0.0
    %1331 = vmatprep.subr.mxu0 0.0
    %1332 = vmatpush1.msra.mxu0 0.0
    %1333 = vmatprep.subr.mxu0 0.0
    %1334 = vmatpush1.msra.mxu0 0.0
    %1335 = vmatprep.subr.mxu0 0.0
    %1336 = vmatpush1.msra.mxu0 0.0
    %1337 = vmatprep.subr.mxu0 0.0
    %1338 = vmatpush1.msra.mxu0 0.0
    %1339 = vmatprep.subr.mxu0 0.0
    %1340 = vmatpush1.msra.mxu0 0.0
    %1341 = vmatprep.subr.mxu0 0.0
    %1342 = vmatpush1.msra.mxu0 0.0
    %1343 = vmatprep.subr.mxu0 0.0
    %1344 = vmatpush1.msra.mxu0 0.0
    %1345 = vmatprep.subr.mxu0 0.0
    %1346 = vmatpush1.msra.mxu0 0.0
    %1347 = vmatprep.subr.mxu0 0.0
    %1348 = vmatpush1.msra.mxu0 %v708
    %1349 = vmatprep.subr.mxu0 0.0
    %1350 = vmatpush2.msra.mxu0 0.0
    %1351 = vmatprep.subr.mxu0 0.0
    %1352 = vmatpush2.msra.mxu0 0.0
    %1353 = vmatprep.subr.mxu0 0.0
    %1354 = vmatpush2.msra.mxu0 0.0
    %1355 = vmatprep.subr.mxu0 0.0
    %1356 = vmatpush2.msra.mxu0 0.0
    %1357 = vmatprep.subr.mxu0 0.0
    %1358 = vmatpush2.msra.mxu0 0.0
    %1359 = vmatprep.subr.mxu0 0.0
    %1360 = vmatpush2.msra.mxu0 0.0
    %1361 = vmatprep.subr.mxu0 0.0
    %1362 = vmatpush2.msra.mxu0 0.0
    %1363 = vmatprep.subr.mxu0 0.0
    %1364 = vmatpush2.msra.mxu0 0.0
    %1365 = vmatprep.subr.mxu0 0.0
    %1366 = vmatpush2.msra.mxu0 0.0
    %1367 = vmatprep.subr.mxu0 0.0
    %1368 = vmatpush2.msra.mxu0 0.0
    %1369 = vmatprep.subr.mxu0 0.0
    %1370 = vmatpush2.msra.mxu0 0.0
    %1371 = vmatprep.subr.mxu0 0.0
    %1372 = vmatpush2.msra.mxu0 0.0
    %1373 = vmatprep.subr.mxu0 0.0
    %1374 = vmatpush2.msra.mxu0 0.0
    %1375 = vmatprep.subr.mxu0 0.0
    %1376 = vmatpush2.msra.mxu0 0.0
    %1377 = vmatprep.subr.mxu0 0.0
    %1378 = vmatpush2.msra.mxu0 0.0
    %1379 = vmatprep.subr.mxu0 0.0
    %1380 = vmatpush2.msra.mxu0 0.0
    %1381 = vmatprep.mubr.f32.mxu0 0.0
    %1382 = vmatmul.mubr.f32.gmra.mxu0 %v1164
    %v1383 = vpop.f32.mrf.mxu0
    %v1384 = vadd.f32 0.0, %v1383
    %v1385 = vpop.f32.mrf.mxu0
    %1386 = vdwg.mxu0
    %1387 = vmatprep.subr.mxu0 0.0
    %1388 = vmatpush1.msra.mxu0 0.0
    %1389 = vmatprep.subr.mxu0 0.0
    %1390 = vmatpush1.msra.mxu0 0.0
    %1391 = vmatprep.subr.mxu0 0.0
    %1392 = vmatpush1.msra.mxu0 0.0
    %1393 = vmatprep.subr.mxu0 0.0
    %1394 = vmatpush1.msra.mxu0 0.0
    %1395 = vmatprep.subr.mxu0 0.0
    %1396 = vmatpush1.msra.mxu0 0.0
    %1397 = vmatprep.subr.mxu0 0.0
    %1398 = vmatpush1.msra.mxu0 0.0
    %1399 = vmatprep.subr.mxu0 0.0
    %1400 = vmatpush1.msra.mxu0 0.0
    %1401 = vmatprep.subr.mxu0 0.0
    %1402 = vmatpush1.msra.mxu0 0.0
    %1403 = vmatprep.subr.mxu0 0.0
    %1404 = vmatpush1.msra.mxu0 0.0
    %1405 = vmatprep.subr.mxu0 0.0
    %1406 = vmatpush1.msra.mxu0 0.0
    %1407 = vmatprep.subr.mxu0 0.0
    %1408 = vmatpush1.msra.mxu0 0.0
    %1409 = vmatprep.subr.mxu0 0.0
    %1410 = vmatpush1.msra.mxu0 0.0
    %1411 = vmatprep.subr.mxu0 0.0
    %1412 = vmatpush1.msra.mxu0 0.0
    %1413 = vmatprep.subr.mxu0 0.0
    %1414 = vmatpush1.msra.mxu0 0.0
    %1415 = vmatprep.subr.mxu0 0.0
    %1416 = vmatpush1.msra.mxu0 0.0
    %1417 = vmatprep.subr.mxu0 0.0
    %1418 = vmatpush1.msra.mxu0 %v781
    %1419 = vmatprep.subr.mxu0 0.0
    %1420 = vmatpush2.msra.mxu0 0.0
    %1421 = vmatprep.subr.mxu0 0.0
    %1422 = vmatpush2.msra.mxu0 0.0
    %1423 = vmatprep.subr.mxu0 0.0
    %1424 = vmatpush2.msra.mxu0 0.0
    %1425 = vmatprep.subr.mxu0 0.0
    %1426 = vmatpush2.msra.mxu0 0.0
    %1427 = vmatprep.subr.mxu0 0.0
    %1428 = vmatpush2.msra.mxu0 0.0
    %1429 = vmatprep.subr.mxu0 0.0
    %1430 = vmatpush2.msra.mxu0 0.0
    %1431 = vmatprep.subr.mxu0 0.0
    %1432 = vmatpush2.msra.mxu0 0.0
    %1433 = vmatprep.subr.mxu0 0.0
    %1434 = vmatpush2.msra.mxu0 0.0
    %1435 = vmatprep.subr.mxu0 0.0
    %1436 = vmatpush2.msra.mxu0 0.0
    %1437 = vmatprep.subr.mxu0 0.0
    %1438 = vmatpush2.msra.mxu0 0.0
    %1439 = vmatprep.subr.mxu0 0.0
    %1440 = vmatpush2.msra.mxu0 0.0
    %1441 = vmatprep.subr.mxu0 0.0
    %1442 = vmatpush2.msra.mxu0 0.0
    %1443 = vmatprep.subr.mxu0 0.0
    %1444 = vmatpush2.msra.mxu0 0.0
    %1445 = vmatprep.subr.mxu0 0.0
    %1446 = vmatpush2.msra.mxu0 0.0
    %1447 = vmatprep.subr.mxu0 0.0
    %1448 = vmatpush2.msra.mxu0 0.0
    %1449 = vmatprep.subr.mxu0 0.0
    %1450 = vmatpush2.msra.mxu0 0.0
    %1451 = vmatprep.mubr.f32.mxu0 0.0
    %1452 = vmatmul.mubr.f32.gmra.mxu0 %v1237
    %v1453 = vpop.f32.mrf.mxu0
    %v1454 = vadd.f32 %v1384, %v1453
    %v1455 = vpop.f32.mrf.mxu0
    %1456 = vdwg.mxu0
    %v1457 = vrcp.pop %v1316
    %v1458 = vmul.f32 1.0, %v1457
    %v1459 = vmul.f32 %v1454, %v1458
    %v1460 = vlog2.pop %v1458
    %v1461 = vmul.f32 %v1460, 0.6931472
    %s1462 = scalar_lea.vmem %s16, 2
    %v1463 = vld [vmem:[%s1462] sm:$0x3]
    %v1464 = vrsqrt.pop %v1316
    %v1465 = vmul.f32 %v1463, %v1464
    %v1466 = vadd.f32 %v1465, %v1459
    %v1467 = vmul.f32 %v527, 0.5
    %v1468 = vmul.f32 %v1467, 1.442695
    %v1469 = vpow.pop %v1468
    %v1470 = vmul.f32 %v1463, %v1469
    %v1471 = vadd.f32 %v1470, %v361
    %v1472 = vmul.f32 %v870, %v1466
    %v1473 = vmul.f32 %v877, %v1471
    %v1474 = vadd.f32 %v1472, %v1473
    %v1475 = vld [vmem:[%s7] sm:$0x3f]
    %v1476 = vld [vmem:[%s8] sm:$0x1]
    %v1478 = vlaneseq
    %v1479 = vshrl.u32 %v1478, 7
    %v1480 = vsub.s32 0, %v1479
    %v1481 = vrot.slane %v1476, %v1480
    %v1484 = vsel %vm889, %v1474, 0
    %v1487 = vsel %vm893, %v1475, 0
    %1489 = vmatprep.subr.mxu0 0.0
    %1490 = vmatpush1.msra.mxu0 0.0
    %1491 = vmatprep.subr.mxu0 0.0
    %1492 = vmatpush1.msra.mxu0 0.0
    %1493 = vmatprep.subr.mxu0 0.0
    %1494 = vmatpush1.msra.mxu0 0.0
    %1495 = vmatprep.subr.mxu0 0.0
    %1496 = vmatpush1.msra.mxu0 0.0
    %1497 = vmatprep.subr.mxu0 0.0
    %1498 = vmatpush1.msra.mxu0 0.0
    %1499 = vmatprep.subr.mxu0 0.0
    %1500 = vmatpush1.msra.mxu0 0.0
    %1501 = vmatprep.subr.mxu0 0.0
    %1502 = vmatpush1.msra.mxu0 0.0
    %1503 = vmatprep.subr.mxu0 0.0
    %1504 = vmatpush1.msra.mxu0 0.0
    %1505 = vmatprep.subr.mxu0 0.0
    %1506 = vmatpush1.msra.mxu0 0.0
    %1507 = vmatprep.subr.mxu0 0.0
    %1508 = vmatpush1.msra.mxu0 0.0
    %1509 = vmatprep.subr.mxu0 0.0
    %1510 = vmatpush1.msra.mxu0 0.0
    %1511 = vmatprep.subr.mxu0 0.0
    %1512 = vmatpush1.msra.mxu0 0.0
    %1513 = vmatprep.subr.mxu0 0.0
    %1514 = vmatpush1.msra.mxu0 0.0
    %1515 = vmatprep.subr.mxu0 0.0
    %1516 = vmatpush1.msra.mxu0 0.0
    %1517 = vmatprep.subr.mxu0 0.0
    %1518 = vmatpush1.msra.mxu0 0.0
    %1519 = vmatprep.subr.mxu0 0.0
    %1520 = vmatpush1.msra.mxu0 %v1487
    %1521 = vmatprep.subr.mxu0 0.0
    %1522 = vmatpush2.msra.mxu0 0.0
    %1523 = vmatprep.subr.mxu0 0.0
    %1524 = vmatpush2.msra.mxu0 0.0
    %1525 = vmatprep.subr.mxu0 0.0
    %1526 = vmatpush2.msra.mxu0 0.0
    %1527 = vmatprep.subr.mxu0 0.0
    %1528 = vmatpush2.msra.mxu0 0.0
    %1529 = vmatprep.subr.mxu0 0.0
    %1530 = vmatpush2.msra.mxu0 0.0
    %1531 = vmatprep.subr.mxu0 0.0
    %1532 = vmatpush2.msra.mxu0 0.0
    %1533 = vmatprep.subr.mxu0 0.0
    %1534 = vmatpush2.msra.mxu0 0.0
    %1535 = vmatprep.subr.mxu0 0.0
    %1536 = vmatpush2.msra.mxu0 0.0
    %1537 = vmatprep.subr.mxu0 0.0
    %1538 = vmatpush2.msra.mxu0 0.0
    %1539 = vmatprep.subr.mxu0 0.0
    %1540 = vmatpush2.msra.mxu0 0.0
    %1541 = vmatprep.subr.mxu0 0.0
    %1542 = vmatpush2.msra.mxu0 0.0
    %1543 = vmatprep.subr.mxu0 0.0
    %1544 = vmatpush2.msra.mxu0 0.0
    %1545 = vmatprep.subr.mxu0 0.0
    %1546 = vmatpush2.msra.mxu0 0.0
    %1547 = vmatprep.subr.mxu0 0.0
    %1548 = vmatpush2.msra.mxu0 0.0
    %1549 = vmatprep.subr.mxu0 0.0
    %1550 = vmatpush2.msra.mxu0 0.0
    %1551 = vmatprep.subr.mxu0 0.0
    %1552 = vmatpush2.msra.mxu0 0.0
    %1553 = vmatprep.mubr.f32.mxu0 0.0
    %1554 = vmatmul.mubr.f32.gmra.mxu0 %v1484
    %v1555 = vpop.f32.mrf.mxu0
    %v1556 = vadd.f32 %v1481, %v1555
    %v1557 = vpop.f32.mrf.mxu0
    %1558 = vdwg.mxu0
    %v1559 = vxor.u32 %v1556, 2147483648
    %v1560 = vmul.f32 %v1559, 1.442695
    %v1561 = vpow.pop %v1560
    %v1562 = vadd.f32 %v1561, 1.0
    %v1563 = vrcp.pop %v1562
    %v1564 = vmul.f32 1.0, %v1563
    %v1565 = vmul.f32 %v1556, %v1564
    %v1566 = vld [vmem:[%s9] sm:$0xff]
    %v1567 = vld [vmem:[%s9 + $0x8] sm:$0xff]
    %v1568 = vld [vmem:[%s9 + $0x10] sm:$0xff]
    %v1569 = vld [vmem:[%s9 + $0x18] sm:$0xff]
    %v1570 = vld [vmem:[%s10] sm:$0x1]
    %v1572 = vlaneseq
    %v1573 = vshrl.u32 %v1572, 7
    %v1574 = vsub.s32 0, %v1573
    %v1575 = vrot.slane %v1570, %v1574
    %v1578 = vsel %vm116, %v1565, 0
    %1580 = vmatprep.subr.mxu0 0.0
    %1581 = vmatpush1.msra.mxu0 0.0
    %1582 = vmatprep.subr.mxu0 0.0
    %1583 = vmatpush1.msra.mxu0 0.0
    %1584 = vmatprep.subr.mxu0 0.0
    %1585 = vmatpush1.msra.mxu0 0.0
    %1586 = vmatprep.subr.mxu0 0.0
    %1587 = vmatpush1.msra.mxu0 0.0
    %1588 = vmatprep.subr.mxu0 0.0
    %1589 = vmatpush1.msra.mxu0 0.0
    %1590 = vmatprep.subr.mxu0 0.0
    %1591 = vmatpush1.msra.mxu0 0.0
    %1592 = vmatprep.subr.mxu0 0.0
    %1593 = vmatpush1.msra.mxu0 0.0
    %1594 = vmatprep.subr.mxu0 0.0
    %1595 = vmatpush1.msra.mxu0 0.0
    %1596 = vmatprep.subr.mxu0 0.0
    %1597 = vmatpush1.msra.mxu0 0.0
    %1598 = vmatprep.subr.mxu0 0.0
    %1599 = vmatpush1.msra.mxu0 0.0
    %1600 = vmatprep.subr.mxu0 0.0
    %1601 = vmatpush1.msra.mxu0 0.0
    %1602 = vmatprep.subr.mxu0 0.0
    %1603 = vmatpush1.msra.mxu0 0.0
    %1604 = vmatprep.subr.mxu0 0.0
    %1605 = vmatpush1.msra.mxu0 %v1569
    %1606 = vmatprep.subr.mxu0 0.0
    %1607 = vmatpush1.msra.mxu0 %v1568
    %1608 = vmatprep.subr.mxu0 0.0
    %1609 = vmatpush1.msra.mxu0 %v1567
    %1610 = vmatprep.subr.mxu0 0.0
    %1611 = vmatpush1.msra.mxu0 %v1566
    %1612 = vmatprep.subr.mxu0 0.0
    %1613 = vmatpush2.msra.mxu0 0.0
    %1614 = vmatprep.subr.mxu0 0.0
    %1615 = vmatpush2.msra.mxu0 0.0
    %1616 = vmatprep.subr.mxu0 0.0
    %1617 = vmatpush2.msra.mxu0 0.0
    %1618 = vmatprep.subr.mxu0 0.0
    %1619 = vmatpush2.msra.mxu0 0.0
    %1620 = vmatprep.subr.mxu0 0.0
    %1621 = vmatpush2.msra.mxu0 0.0
    %1622 = vmatprep.subr.mxu0 0.0
    %1623 = vmatpush2.msra.mxu0 0.0
    %1624 = vmatprep.subr.mxu0 0.0
    %1625 = vmatpush2.msra.mxu0 0.0
    %1626 = vmatprep.subr.mxu0 0.0
    %1627 = vmatpush2.msra.mxu0 0.0
    %1628 = vmatprep.subr.mxu0 0.0
    %1629 = vmatpush2.msra.mxu0 0.0
    %1630 = vmatprep.subr.mxu0 0.0
    %1631 = vmatpush2.msra.mxu0 0.0
    %1632 = vmatprep.subr.mxu0 0.0
    %1633 = vmatpush2.msra.mxu0 0.0
    %1634 = vmatprep.subr.mxu0 0.0
    %1635 = vmatpush2.msra.mxu0 0.0
    %1636 = vmatprep.subr.mxu0 0.0
    %1637 = vmatpush2.msra.mxu0 0.0
    %1638 = vmatprep.subr.mxu0 0.0
    %1639 = vmatpush2.msra.mxu0 0.0
    %1640 = vmatprep.subr.mxu0 0.0
    %1641 = vmatpush2.msra.mxu0 0.0
    %1642 = vmatprep.subr.mxu0 0.0
    %1643 = vmatpush2.msra.mxu0 0.0
    %1644 = vmatprep.mubr.f32.mxu0 0.0
    %1645 = vmatmul.mubr.f32.gmra.mxu0 %v1578
    %v1646 = vpop.f32.mrf.mxu0
    %v1647 = vadd.f32 %v1575, %v1646
    %v1648 = vpop.f32.mrf.mxu0
    %1649 = vdwg.mxu0
    %v1650 = vxor.u32 %v1647, 2147483648
    %v1651 = vmul.f32 %v1650, 1.442695
    %v1652 = vpow.pop %v1651
    %v1653 = vadd.f32 %v1652, 1.0
    %v1654 = vrcp.pop %v1653
    %v1655 = vmul.f32 1.0, %v1654
    %v1656 = vmul.f32 %v1647, %v1655
    %v1657 = vld [vmem:[%s11] sm:$0xff]
    %v1658 = vld [vmem:[%s11 + $0x8] sm:$0xff]
    %v1659 = vld [vmem:[%s11 + $0x10] sm:$0xff]
    %v1660 = vld [vmem:[%s11 + $0x18] sm:$0xff]
    %v1661 = vld [vmem:[%s12] sm:$0x1]
    %v1663 = vlaneseq
    %v1664 = vshrl.u32 %v1663, 7
    %v1665 = vsub.s32 0, %v1664
    %v1666 = vrot.slane %v1661, %v1665
    %v1669 = vsel %vm116, %v1656, 0
    %1671 = vmatprep.subr.mxu0 0.0
    %1672 = vmatpush1.msra.mxu0 0.0
    %1673 = vmatprep.subr.mxu0 0.0
    %1674 = vmatpush1.msra.mxu0 0.0
    %1675 = vmatprep.subr.mxu0 0.0
    %1676 = vmatpush1.msra.mxu0 0.0
    %1677 = vmatprep.subr.mxu0 0.0
    %1678 = vmatpush1.msra.mxu0 0.0
    %1679 = vmatprep.subr.mxu0 0.0
    %1680 = vmatpush1.msra.mxu0 0.0
    %1681 = vmatprep.subr.mxu0 0.0
    %1682 = vmatpush1.msra.mxu0 0.0
    %1683 = vmatprep.subr.mxu0 0.0
    %1684 = vmatpush1.msra.mxu0 0.0
    %1685 = vmatprep.subr.mxu0 0.0
    %1686 = vmatpush1.msra.mxu0 0.0
    %1687 = vmatprep.subr.mxu0 0.0
    %1688 = vmatpush1.msra.mxu0 0.0
    %1689 = vmatprep.subr.mxu0 0.0
    %1690 = vmatpush1.msra.mxu0 0.0
    %1691 = vmatprep.subr.mxu0 0.0
    %1692 = vmatpush1.msra.mxu0 0.0
    %1693 = vmatprep.subr.mxu0 0.0
    %1694 = vmatpush1.msra.mxu0 0.0
    %1695 = vmatprep.subr.mxu0 0.0
    %1696 = vmatpush1.msra.mxu0 %v1660
    %1697 = vmatprep.subr.mxu0 0.0
    %1698 = vmatpush1.msra.mxu0 %v1659
    %1699 = vmatprep.subr.mxu0 0.0
    %1700 = vmatpush1.msra.mxu0 %v1658
    %1701 = vmatprep.subr.mxu0 0.0
    %1702 = vmatpush1.msra.mxu0 %v1657
    %1703 = vmatprep.subr.mxu0 0.0
    %1704 = vmatpush2.msra.mxu0 0.0
    %1705 = vmatprep.subr.mxu0 0.0
    %1706 = vmatpush2.msra.mxu0 0.0
    %1707 = vmatprep.subr.mxu0 0.0
    %1708 = vmatpush2.msra.mxu0 0.0
    %1709 = vmatprep.subr.mxu0 0.0
    %1710 = vmatpush2.msra.mxu0 0.0
    %1711 = vmatprep.subr.mxu0 0.0
    %1712 = vmatpush2.msra.mxu0 0.0
    %1713 = vmatprep.subr.mxu0 0.0
    %1714 = vmatpush2.msra.mxu0 0.0
    %1715 = vmatprep.subr.mxu0 0.0
    %1716 = vmatpush2.msra.mxu0 0.0
    %1717 = vmatprep.subr.mxu0 0.0
    %1718 = vmatpush2.msra.mxu0 0.0
    %1719 = vmatprep.subr.mxu0 0.0
    %1720 = vmatpush2.msra.mxu0 0.0
    %1721 = vmatprep.subr.mxu0 0.0
    %1722 = vmatpush2.msra.mxu0 0.0
    %1723 = vmatprep.subr.mxu0 0.0
    %1724 = vmatpush2.msra.mxu0 0.0
    %1725 = vmatprep.subr.mxu0 0.0
    %1726 = vmatpush2.msra.mxu0 0.0
    %1727 = vmatprep.subr.mxu0 0.0
    %1728 = vmatpush2.msra.mxu0 0.0
    %1729 = vmatprep.subr.mxu0 0.0
    %1730 = vmatpush2.msra.mxu0 0.0
    %1731 = vmatprep.subr.mxu0 0.0
    %1732 = vmatpush2.msra.mxu0 0.0
    %1733 = vmatprep.subr.mxu0 0.0
    %1734 = vmatpush2.msra.mxu0 0.0
    %1735 = vmatprep.mubr.f32.mxu0 0.0
    %1736 = vmatmul.mubr.f32.gmra.mxu0 %v1669
    %v1737 = vpop.f32.mrf.mxu0
    %v1738 = vadd.f32 %v1666, %v1737
    %v1739 = vpop.f32.mrf.mxu0
    %1740 = vdwg.mxu0
    %s1741 = scalar_lea.vmem %s17, 2
    %1742 = vst.msk [vmem:[%s1741] sm:$0x3] %vm1149, %v361
    %s1743 = scalar_lea.vmem %s17, 6
    %1744 = vst.msk [vmem:[%s1743] sm:$0x3] %vm1149, %v527
    %s1745 = scalar_lea.vmem %s17, 10
    %1746 = vst.msk [vmem:[%s1745] sm:$0x3] %vm1149, %v1459
    %s1747 = scalar_lea.vmem %s17, 14
    %1748 = vst.msk [vmem:[%s1747] sm:$0x3] %vm1149, %v1461
    %s1749 = scalar_lea.vmem [#allocation2], 2
    %1750 = vst.msk [vmem:[%s1749] sm:$0x3] %vm1157, %v1738
    // Predicated region
    $region70: #{tpu_custom_call.1} parent=1 // pred_check
      _
    $region71: #{tpu_custom_call.1} parent=1 // pred_check_branch
      %1752 = sbr.rel (0) target = $region73
    $region72: #{tpu_custom_call.1} parent=1 // pred_region
      _
    $region73: #{tpu_custom_call.1} parent=1 // pred_fallthru
      _
    // Predicated region
    $region74: #{tpu_custom_call.1} parent=1 // pred_check
      _
    $region75: #{tpu_custom_call.1} parent=1 // pred_check_branch
      %1754 = sbr.rel (0) target = $region77
    $region76: #{tpu_custom_call.1} parent=1 // pred_region
      %s1756 = ssub.s32 64, 64
      %1757 = vsyncadd [#allocation3], %s1756
      %s1758 = sshll.u32 [#allocation2], 4
      %s1759 = int_to_ptr.vmem [resolvable:$true] %s1758
      %1764 = dma.vmem_to_hbm [thread:$0]  %s1759, 64, %s18, [#allocation3], 32, 32, 2
    $region77: #{tpu_custom_call.1} parent=1 // pred_fallthru
      _
    // Predicated region
    $region78: #{tpu_custom_call.1} parent=1 // pred_check
      _
    $region79: #{tpu_custom_call.1} parent=1 // pred_check_branch
      %1766 = sbr.rel (0) target = $region81
    $region80: #{tpu_custom_call.1} parent=1 // pred_region
      _
    $region81: #{tpu_custom_call.1} parent=1 // pred_fallthru
      _
    // Predicated region
    $region82: #{tpu_custom_call.1} parent=1 // pred_check
      _
    $region83: #{tpu_custom_call.1} parent=1 // pred_check_branch
      %1768 = sbr.rel (0) target = $region85
    $region84: #{tpu_custom_call.1} parent=1 // pred_region
      %1769 = dma.done [#allocation3], 64
    $region85: #{tpu_custom_call.1} parent=1 // pred_fallthru
      _
    %1770 = vsyncpa [#allocation3], 1

</llo_original>
